<compile_context>
chip_gen: v7x
topology: tpu7x:2x2x1
jax: 0.10.0
libtpu: 0.0.40
codegen_flags: <defaults>
</compile_context>

<pallas_src>
import functools

import numpy as np
import jax
import jax.numpy as jnp
from jax.experimental import pallas as pl
from jax.experimental.pallas import tpu as pltpu


# ----------------------------------------------------------------------------
# Bilinear interpolation (PyTorch F.interpolate, align_corners=False)
# ----------------------------------------------------------------------------
def _bilinear_matrix_1d(in_size: int, out_size: int) -> np.ndarray:
    m = np.zeros((out_size, in_size), dtype=np.float64)
    scale = in_size / out_size
    for i in range(out_size):
        src = max((i + 0.5) * scale - 0.5, 0.0)   # PyTorch clamps negative src
        i0 = min(int(np.floor(src)), in_size - 1)
        i1 = min(i0 + 1, in_size - 1)
        frac = src - i0
        m[i, i0] += 1.0 - frac
        m[i, i1] += frac
    return m


def _bilinear_matrix_2d(h_in, w_in, h_out, w_out) -> np.ndarray:
    # Flattened-spatial interpolation: out_flat = M @ in_flat (reference only).
    return np.kron(_bilinear_matrix_1d(h_in, h_out),
                   _bilinear_matrix_1d(w_in, w_out)).astype(np.float32)


@functools.lru_cache(maxsize=None)
def _pool_row_vector(h_in, w_in, h_out, w_out) -> np.ndarray:
    """Column means of the flattened bilinear-upsample matrix: the row r with
    mean_{h_out*w_out}(upsample(x)) == r @ x_flat.  Shape (1, h_in*w_in)."""
    rh = _bilinear_matrix_1d(h_in, h_out).mean(axis=0)
    rw = _bilinear_matrix_1d(w_in, w_out).mean(axis=0)
    return np.kron(rh, rw)[None, :]


def _round_up(n, m):
    return ((n + m - 1) // m) * m


def _pad_last(a, new_cols):
    pad = new_cols - a.shape[-1]
    if pad:
        a = jnp.pad(a, [(0, 0)] * (a.ndim - 1) + [(0, pad)])
    return a


def _pad_axis(a, axis, new_size):
    pad = new_size - a.shape[axis]
    if pad <= 0:
        return a
    cfg = [(0, 0)] * a.ndim
    cfg[axis] = (0, pad)
    return jnp.pad(a, cfg)


def _split_hi_lo(vec_np, new_cols):
    """(1,S) float row -> (2,new_cols) bf16 [hi; lo] with hi+lo == row (~1e-5 rel)."""
    r = np.zeros((1, new_cols), np.float32)
    r[:, :vec_np.shape[1]] = vec_np.astype(np.float32)
    r32 = jnp.asarray(r, jnp.float32)
    hi = r32.astype(jnp.bfloat16)
    lo = (r32 - hi.astype(jnp.float32)).astype(jnp.bfloat16)
    return jnp.concatenate([hi, lo], axis=0)


def _pick_batch_block(batch, per_sample_act_bytes):
    """~24 MiB of triple-buffered activations (fits v7x's 64 MiB VMEM next to
    the single-buffered resident weights); keep >=2 grid steps for megacore."""
    budget = 24 * 1024 * 1024
    bb = max(1, budget // max(1, 3 * per_sample_act_bytes))
    bb = int(min(bb, 16, batch))
    if batch >= 2:
        bb = min(bb, (batch + 1) // 2)
    return max(1, bb)


def _vmem_limit_bytes():
    try:
        cap = int(pltpu.get_tpu_info().vmem_capacity_bytes)
    except Exception:
        return None
    # leave headroom for compiler-internal scratch (v7x: 64 MiB physical).
    return max(32 * 1024 * 1024, min(cap - cap // 4, 96 * 1024 * 1024))


# ----------------------------------------------------------------------------
# Pallas kernel: one grid step = one batch block (Bb images).
# ----------------------------------------------------------------------------
def head_kernel(x2_ref, x3_ref, x4_ref,
                ones2_ref, r3_ref, r4_ref,
                w2_ref, w3_ref, w4_ref,
                g1a_ref, g1b_ref, g1c_ref, g2_ref,
                s1_ref, s2_ref, wc_ref, bc_ref,
                out_ref, *, bb, inv_s2):
    f32 = jnp.float32
    bf16 = jnp.bfloat16

    def sigmoid(z):
        return 1.0 / (1.0 + jnp.exp(-z))

    # --- Weighted spatial pools (bilinear upsample + global-avg collapse) ---
    # Per batch row: (1|2, S) @ (S, C) bf16 MXU matmuls, f32 accumulation.
    rows2, rows3, rows4 = [], [], []
    for b in range(bb):
        rows2.append(jnp.dot(ones2_ref[...], x2_ref[b], preferred_element_type=f32))
        t3 = jnp.dot(r3_ref[...], x3_ref[b], preferred_element_type=f32)
        rows3.append(t3[0:1, :] + t3[1:2, :])           # hi + lo bf16 parts
        t4 = jnp.dot(r4_ref[...], x4_ref[b], preferred_element_type=f32)
        rows4.append(t4[0:1, :] + t4[1:2, :])
    mx2 = jnp.concatenate(rows2, axis=0) * inv_s2        # (Bb, C2) exact mean
    mx3 = jnp.concatenate(rows3, axis=0)                 # (Bb, C3)
    mx4 = jnp.concatenate(rows4, axis=0)                 # (Bb, C4)

    # --- 1x1-conv projections applied to pooled vectors (conv is linear) ---
    p2 = jnp.dot(mx2.astype(bf16), w2_ref[...], preferred_element_type=f32)  # (Bb, CF)
    p3 = jnp.dot(mx3.astype(bf16), w3_ref[...], preferred_element_type=f32)
    p4 = jnp.dot(mx4.astype(bf16), w4_ref[...], preferred_element_type=f32)

    # --- GatedFusion MLP: cat([p2,p3,p4]) @ Wg1 == p2@Wg1a + p3@Wg1b + p4@Wg1c
    h = (jnp.dot(p2.astype(bf16), g1a_ref[...], preferred_element_type=f32)
         + jnp.dot(p3.astype(bf16), g1b_ref[...], preferred_element_type=f32)
         + jnp.dot(p4.astype(bf16), g1c_ref[...], preferred_element_type=f32))
    h = jnp.maximum(h, 0.0)
    alpha = sigmoid(jnp.dot(h.astype(bf16), g2_ref[...], preferred_element_type=f32))

    # mean_S(a2*A2 + a3*A3 + a4*A4) == a2*p2 + a3*p3 + a4*p4
    y = alpha[:, 0:1] * p2 + alpha[:, 1:2] * p3 + alpha[:, 2:3] * p4         # (Bb, CF)

    # --- SE on the fused pooled vector (per-channel scale commutes w/ mean) ---
    se_h = jnp.maximum(
        jnp.dot(y.astype(bf16), s1_ref[...], preferred_element_type=f32), 0.0)
    s = sigmoid(jnp.dot(se_h.astype(bf16), s2_ref[...], preferred_element_type=f32))

    # --- classifier: Dropout = identity at inference; mean_S(x_se) == y * s ---
    logits = jnp.dot((y * s).astype(bf16), wc_ref[...],
                     preferred_element_type=f32) + bc_ref[...]
    out_ref[0] = logits                                                       # (Bb, NCP)


# ----------------------------------------------------------------------------
# Wrapper
# ----------------------------------------------------------------------------
def multiscale_gated_se_head(x2, x3, x4, params, *, batch_block=None):
    """Fused head.  x2/x3/x4: NHWC backbone feature maps (B,H,W,C) for
    layer2/3/4 (bf16 preferred: the cast is then a no-op, no extra HBM layout
    pass).  Returns (B, num_classes) f32 logits."""
    bf16 = jnp.bfloat16
    B, H2, W2, C2 = x2.shape
    _, H3, W3, C3 = x3.shape
    _, H4, W4, C4 = x4.shape
    S2, S3, S4 = H2 * W2, H3 * W3, H4 * W4
    S2p, S3p, S4p = (_round_up(s, 16) for s in (S2, S3, S4))   # bf16 sublane pair

    w2, w3, w4, wg1, wg2, ws1, ws2, wc, bc = params
    CF = w2.shape[1]
    NC = wc.shape[1]
    GHP = _round_up(wg1.shape[1], 128)
    ALP = _round_up(wg2.shape[1], 128)
    SEP = _round_up(ws1.shape[1], 128)
    NCP = _round_up(NC, 128)

    per_sample_bytes = 2 * (S2p * C2 + S3p * C3 + S4p * C4)
    Bb = int(batch_block) if batch_block else _pick_batch_block(B, per_sample_bytes)
    Bp = _round_up(B, Bb)
    n_steps = Bp // Bb

    # NHWC -> (B, S, C) is a free reshape; pad S to a multiple of 16 and batch
    # to a multiple of Bb with zeros (exact: pool rows are zero on pad).
    def prep(x, S, Sp, C):
        x = x.reshape(B, S, C).astype(bf16)
        x = _pad_axis(x, 1, Sp)
        return _pad_axis(x, 0, Bp)

    x2f = prep(x2, S2, S2p, C2)
    x3f = prep(x3, S3, S3p, C3)
    x4f = prep(x4, S4, S4p, C4)

    # Pool rows: x2 = bf16 ones-row (1/S2 folded into the f32 accumulator,
    # exact); x3/x4 = bilinear column means split into hi+lo bf16 rows.
    ones2_np = np.zeros((1, S2p), np.float32)
    ones2_np[0, :S2] = 1.0
    ones2 = jnp.asarray(ones2_np, dtype=bf16)
    r3 = _split_hi_lo(_pool_row_vector(H3, W3, H2, W2), S3p)    # (2, S3p)
    r4 = _split_hi_lo(_pool_row_vector(H4, W4, H2, W2), S4p)    # (2, S4p)

    # Weights: bf16, zero-padded to lane-dense trailing dims (exact through
    # matmul / ReLU); classifier bias stays f32.
    w2c, w3c, w4c = (w.astype(bf16) for w in (w2, w3, w4))
    g1 = _pad_last(wg1.astype(bf16), GHP)                       # (3*CF, GHP)
    g1a, g1b, g1c = g1[0:CF], g1[CF:2 * CF], g1[2 * CF:3 * CF]
    g2 = _pad_last(_pad_axis(wg2.astype(bf16), 0, GHP), ALP)    # (GHP, ALP)
    s1 = _pad_last(ws1.astype(bf16), SEP)                       # (CF, SEP)
    s2w = _pad_axis(ws2.astype(bf16), 0, SEP)                   # (SEP, CF)
    wcp = _pad_last(wc.astype(bf16), NCP)                       # (CF, NCP)
    bcp = _pad_last(bc.astype(jnp.float32), NCP)                # (1, NCP)

    operands = (x2f, x3f, x4f, ones2, r3, r4, w2c, w3c, w4c,
                g1a, g1b, g1c, g2, s1, s2w, wcp, bcp)
    kernel = functools.partial(head_kernel, bb=Bb, inv_s2=1.0 / float(S2))
    vmem_limit = _vmem_limit_bytes()

    def build(optimized):
        def spec(shape, index_map, mode):
            if optimized and mode is not None:
                return pl.BlockSpec(shape, index_map, pipeline_mode=mode)
            return pl.BlockSpec(shape, index_map)

        act_mode = pl.Buffered(3) if optimized else None      # deeper streaming
        const_mode = pl.Buffered(1) if optimized else None    # single-buffer weights
        in_specs = [
            spec((Bb, S2p, C2), lambda i: (i, 0, 0), act_mode),
            spec((Bb, S3p, C3), lambda i: (i, 0, 0), act_mode),
            spec((Bb, S4p, C4), lambda i: (i, 0, 0), act_mode),
        ]
        for a in operands[3:]:
            zmap = (0,) * a.ndim
            in_specs.append(spec(tuple(a.shape), lambda i, _z=zmap: _z, const_mode))
        out_spec = pl.BlockSpec((1, Bb, NCP), lambda i: (i, 0, 0))

        cp_kwargs = dict(dimension_semantics=("parallel",))
        if optimized and vmem_limit is not None:
            cp_kwargs["vmem_limit_bytes"] = int(vmem_limit)

        cost = None
        if optimized:
            const_bytes = sum(int(np.prod(a.shape)) * a.dtype.itemsize
                              for a in operands[3:])
            flops = 2 * Bp * (S2p * C2 + 2 * S3p * C3 + 2 * S4p * C4
                              + (C2 + C3 + C4) * CF + 3 * CF * GHP + GHP * ALP
                              + CF * SEP + SEP * CF + CF * NCP)
            cost = pl.CostEstimate(
                flops=int(flops),
                transcendentals=int(Bp * (ALP + CF)),
                bytes_accessed=int(Bp * per_sample_bytes + const_bytes
                                   + Bp * NCP * 4))

        return pl.pallas_call(
            kernel,
            out_shape=jax.ShapeDtypeStruct((n_steps, Bb, NCP), jnp.float32),
            grid=(n_steps,),
            in_specs=in_specs,
            out_specs=out_spec,
            compiler_params=pltpu.CompilerParams(**cp_kwargs),
            cost_estimate=cost,
        )

    try:
        out = jax.block_until_ready(build(True)(*operands))
    except Exception:
        # Fallback: identical kernel with default buffering / compiler params.
        out = jax.block_until_ready(build(False)(*operands))
    return out.reshape(Bp, NCP)[:B, :NC]


# ----------------------------------------------------------------------------
# Pure-JAX reference: the ORIGINAL per-pixel pipeline (upsample -> 1x1 conv ->
# gated fusion -> SE -> classifier) in f32; validates the linearity collapse.
# ----------------------------------------------------------------------------
def reference_head(x2, x3, x4, params):
    f32 = jnp.float32
    B, H2, W2, C2 = x2.shape
    _, H3, W3, C3 = x3.shape
    _, H4, W4, C4 = x4.shape
    w2, w3, w4, wg1, wg2, ws1, ws2, wc, bc = [jnp.asarray(p, f32) for p in params]
    m3 = jnp.asarray(_bilinear_matrix_2d(H3, W3, H2, W2))
    m4 = jnp.asarray(_bilinear_matrix_2d(H4, W4, H2, W2))

    x2f = x2.astype(f32).reshape(B, H2 * W2, C2)
    x3f = x3.astype(f32).reshape(B, H3 * W3, C3)
    x4f = x4.astype(f32).reshape(B, H4 * W4, C4)

    x3u = jnp.einsum("st,btc->bsc", m3, x3f)
    x4u = jnp.einsum("st,btc->bsc", m4, x4f)
    a2, a3, a4 = x2f @ w2, x3u @ w3, x4u @ w4
    p2, p3, p4 = a2.mean(1), a3.mean(1), a4.mean(1)
    cat = jnp.concatenate([p2, p3, p4], axis=-1)
    alpha = jax.nn.sigmoid(jnp.maximum(cat @ wg1, 0.0) @ wg2)        # (B, 3)
    fused = (alpha[:, 0:1, None] * a2 + alpha[:, 1:2, None] * a3
             + alpha[:, 2:3, None] * a4)
    y = fused.mean(1)
    s = jax.nn.sigmoid(jnp.maximum(y @ ws1, 0.0) @ ws2)
    pooled = (fused * s[:, None, :]).mean(1)
    return pooled @ wc + bc[0]


# ----------------------------------------------------------------------------
# Main
# ----------------------------------------------------------------------------
if __name__ == "__main__":
    # Small shapes preserving the module's ratios:
    #   layer2:layer3:layer4 channels = 512:1024:2048 -> 64:128:256 (scaled /8)
    #   projection channels 1024 -> 128; gate hidden = CF//2; SE reduction = 16
    B = 4
    C2, C3, C4 = 64, 128, 256
    CF = 128
    H2 = W2 = 16
    H3 = W3 = 8
    H4 = W4 = 4
    NUM_CLASSES = 100
    GATE_HIDDEN = CF // 2
    SE_HIDDEN = CF // 16

    key = jax.random.PRNGKey(0)
    keys = jax.random.split(key, 12)
    bf16 = jnp.bfloat16
    sc = 0.05

    # Backbone feature maps (stand-ins for ResNeSt-101e layer2/3/4 outputs),
    # in the NHWC bf16 layout a TPU backbone emits -> no wrapper layout pass.
    x2 = jax.random.normal(keys[0], (B, H2, W2, C2), jnp.float32).astype(bf16)
    x3 = jax.random.normal(keys[1], (B, H3, W3, C3), jnp.float32).astype(bf16)
    x4 = jax.random.normal(keys[2], (B, H4, W4, C4), jnp.float32).astype(bf16)

    def w(k, shape):
        return (jax.random.normal(k, shape, jnp.float32) * sc).astype(bf16)

    params = (
        w(keys[3], (C2, CF)),                 # conv2_1x1 (bias=False)
        w(keys[4], (C3, CF)),                 # conv3_1x1 (bias=False)
        w(keys[5], (C4, CF)),                 # conv4_1x1 (bias=False)
        w(keys[6], (3 * CF, GATE_HIDDEN)),    # gate fc1 (bias=False)
        w(keys[7], (GATE_HIDDEN, 3)),         # gate fc2 (bias=False)
        w(keys[8], (CF, SE_HIDDEN)),          # se fc1 (bias=False)
        w(keys[9], (SE_HIDDEN, CF)),          # se fc2 (bias=False)
        w(keys[10], (CF, NUM_CLASSES)),       # classifier weight
        w(keys[11], (1, NUM_CLASSES)),        # classifier bias
    )

    logits = jax.block_until_ready(multiscale_gated_se_head(x2, x3, x4, params))

    with jax.default_matmul_precision("float32"):
        ref = jax.block_until_ready(reference_head(x2, x3, x4, params))

    assert logits.shape == (B, NUM_CLASSES)
    assert np.allclose(np.asarray(logits), np.asarray(ref), atol=2e-3, rtol=2e-2), (
        "Pallas kernel disagrees with JAX reference")
    print("KERNEL_OK")
</pallas_src>

<mosaic_0001>
module attributes {stable_mosaic.version = 11 : i64} {
  func.func @head_kernel(%arg0: i32, %arg1: memref<2x256x64xbf16, #tpu.memory_space<vmem>>, %arg2: memref<2x64x128xbf16, #tpu.memory_space<vmem>>, %arg3: memref<2x16x256xbf16, #tpu.memory_space<vmem>>, %arg4: memref<1x256xbf16, #tpu.memory_space<vmem>>, %arg5: memref<2x64xbf16, #tpu.memory_space<vmem>>, %arg6: memref<2x16xbf16, #tpu.memory_space<vmem>>, %arg7: memref<64x128xbf16, #tpu.memory_space<vmem>>, %arg8: memref<128x128xbf16, #tpu.memory_space<vmem>>, %arg9: memref<256x128xbf16, #tpu.memory_space<vmem>>, %arg10: memref<128x128xbf16, #tpu.memory_space<vmem>>, %arg11: memref<128x128xbf16, #tpu.memory_space<vmem>>, %arg12: memref<128x128xbf16, #tpu.memory_space<vmem>>, %arg13: memref<128x128xbf16, #tpu.memory_space<vmem>>, %arg14: memref<128x128xbf16, #tpu.memory_space<vmem>>, %arg15: memref<128x128xbf16, #tpu.memory_space<vmem>>, %arg16: memref<128x128xbf16, #tpu.memory_space<vmem>>, %arg17: memref<1x128xf32, #tpu.memory_space<vmem>>, %arg18: memref<1x2x128xf32, #tpu.memory_space<vmem>>) attributes {dimension_semantics = [#tpu.dimension_semantics<parallel>], iteration_bounds = array<i64: 2>, scalar_prefetch = 0 : i64, scratch_operands = 0 : i64, tpu.core_type = #tpu.core_type<tc>, window_params = [{transform_indices = @transform_0, window_bounds = array<i64: 2, 256, 64>}, {transform_indices = @transform_1, window_bounds = array<i64: 2, 64, 128>}, {transform_indices = @transform_2, window_bounds = array<i64: 2, 16, 256>}, {pipeline_mode = #tpu.pipeline_mode<synchronous>, transform_indices = @transform_3, window_bounds = array<i64: 1, 256>}, {pipeline_mode = #tpu.pipeline_mode<synchronous>, transform_indices = @transform_4, window_bounds = array<i64: 2, 64>}, {pipeline_mode = #tpu.pipeline_mode<synchronous>, transform_indices = @transform_5, window_bounds = array<i64: 2, 16>}, {pipeline_mode = #tpu.pipeline_mode<synchronous>, transform_indices = @transform_6, window_bounds = array<i64: 64, 128>}, {pipeline_mode = #tpu.pipeline_mode<synchronous>, transform_indices = @transform_7, window_bounds = array<i64: 128, 128>}, {pipeline_mode = #tpu.pipeline_mode<synchronous>, transform_indices = @transform_8, window_bounds = array<i64: 256, 128>}, {pipeline_mode = #tpu.pipeline_mode<synchronous>, transform_indices = @transform_9, window_bounds = array<i64: 128, 128>}, {pipeline_mode = #tpu.pipeline_mode<synchronous>, transform_indices = @transform_10, window_bounds = array<i64: 128, 128>}, {pipeline_mode = #tpu.pipeline_mode<synchronous>, transform_indices = @transform_11, window_bounds = array<i64: 128, 128>}, {pipeline_mode = #tpu.pipeline_mode<synchronous>, transform_indices = @transform_12, window_bounds = array<i64: 128, 128>}, {pipeline_mode = #tpu.pipeline_mode<synchronous>, transform_indices = @transform_13, window_bounds = array<i64: 128, 128>}, {pipeline_mode = #tpu.pipeline_mode<synchronous>, transform_indices = @transform_14, window_bounds = array<i64: 128, 128>}, {pipeline_mode = #tpu.pipeline_mode<synchronous>, transform_indices = @transform_15, window_bounds = array<i64: 128, 128>}, {pipeline_mode = #tpu.pipeline_mode<synchronous>, transform_indices = @transform_16, window_bounds = array<i64: 1, 128>}, {transform_indices = @transform_17, window_bounds = array<i64: 1, 2, 128>}]} {
    %c0 = arith.constant 0 : index
    %c0_0 = arith.constant 0 : index
    %0 = vector.load %arg4[%c0, %c0_0] : memref<1x256xbf16, #tpu.memory_space<vmem>>, vector<1x256xbf16>
    %c0_1 = arith.constant 0 : index
    %c0_2 = arith.constant 0 : index
    %c0_3 = arith.constant 0 : index
    %1 = vector.load %arg1[%c0_1, %c0_2, %c0_3] : memref<2x256x64xbf16, #tpu.memory_space<vmem>>, vector<1x256x64xbf16>
    %2 = vector.shape_cast %1 : vector<1x256x64xbf16> to vector<256x64xbf16>
    %cst = arith.constant dense<0.000000e+00> : vector<1x64xf32>
    %3 = tpu.matmul %0, %2, %cst {dimension_numbers = #tpu.dot_dimension_numbers<[1], [0], [0], [1], [0, 0, 1, 1], [], []>} : vector<1x256xbf16>, vector<256x64xbf16>, vector<1x64xf32> -> vector<1x64xf32>
    %c0_4 = arith.constant 0 : index
    %c0_5 = arith.constant 0 : index
    %4 = vector.load %arg5[%c0_4, %c0_5] : memref<2x64xbf16, #tpu.memory_space<vmem>>, vector<2x64xbf16>
    %c0_6 = arith.constant 0 : index
    %c0_7 = arith.constant 0 : index
    %c0_8 = arith.constant 0 : index
    %5 = vector.load %arg2[%c0_6, %c0_7, %c0_8] : memref<2x64x128xbf16, #tpu.memory_space<vmem>>, vector<1x64x128xbf16>
    %6 = vector.shape_cast %5 : vector<1x64x128xbf16> to vector<64x128xbf16>
    %cst_9 = arith.constant dense<0.000000e+00> : vector<2x128xf32>
    %7 = tpu.matmul %4, %6, %cst_9 {dimension_numbers = #tpu.dot_dimension_numbers<[1], [0], [0], [1], [0, 0, 1, 1], [], []>} : vector<2x64xbf16>, vector<64x128xbf16>, vector<2x128xf32> -> vector<2x128xf32>
    %8 = vector.extract_strided_slice %7 {offsets = [0, 0], sizes = [1, 128], strides = [1, 1]} : vector<2x128xf32> to vector<1x128xf32>
    %9 = vector.extract_strided_slice %7 {offsets = [1, 0], sizes = [1, 128], strides = [1, 1]} : vector<2x128xf32> to vector<1x128xf32>
    %10 = arith.addf %8, %9 : vector<1x128xf32>
    %c0_10 = arith.constant 0 : index
    %c0_11 = arith.constant 0 : index
    %11 = vector.load %arg6[%c0_10, %c0_11] : memref<2x16xbf16, #tpu.memory_space<vmem>>, vector<2x16xbf16>
    %c0_12 = arith.constant 0 : index
    %c0_13 = arith.constant 0 : index
    %c0_14 = arith.constant 0 : index
    %12 = vector.load %arg3[%c0_12, %c0_13, %c0_14] : memref<2x16x256xbf16, #tpu.memory_space<vmem>>, vector<1x16x256xbf16>
    %13 = vector.shape_cast %12 : vector<1x16x256xbf16> to vector<16x256xbf16>
    %cst_15 = arith.constant dense<0.000000e+00> : vector<2x256xf32>
    %14 = tpu.matmul %11, %13, %cst_15 {dimension_numbers = #tpu.dot_dimension_numbers<[1], [0], [0], [1], [0, 0, 1, 1], [], []>} : vector<2x16xbf16>, vector<16x256xbf16>, vector<2x256xf32> -> vector<2x256xf32>
    %15 = vector.extract_strided_slice %14 {offsets = [0, 0], sizes = [1, 256], strides = [1, 1]} : vector<2x256xf32> to vector<1x256xf32>
    %16 = vector.extract_strided_slice %14 {offsets = [1, 0], sizes = [1, 256], strides = [1, 1]} : vector<2x256xf32> to vector<1x256xf32>
    %17 = arith.addf %15, %16 : vector<1x256xf32>
    %c0_16 = arith.constant 0 : index
    %c0_17 = arith.constant 0 : index
    %18 = vector.load %arg4[%c0_16, %c0_17] : memref<1x256xbf16, #tpu.memory_space<vmem>>, vector<1x256xbf16>
    %c1 = arith.constant 1 : index
    %c0_18 = arith.constant 0 : index
    %c0_19 = arith.constant 0 : index
    %19 = vector.load %arg1[%c1, %c0_18, %c0_19] : memref<2x256x64xbf16, #tpu.memory_space<vmem>>, vector<1x256x64xbf16>
    %20 = vector.shape_cast %19 : vector<1x256x64xbf16> to vector<256x64xbf16>
    %cst_20 = arith.constant dense<0.000000e+00> : vector<1x64xf32>
    %21 = tpu.matmul %18, %20, %cst_20 {dimension_numbers = #tpu.dot_dimension_numbers<[1], [0], [0], [1], [0, 0, 1, 1], [], []>} : vector<1x256xbf16>, vector<256x64xbf16>, vector<1x64xf32> -> vector<1x64xf32>
    %c0_21 = arith.constant 0 : index
    %c0_22 = arith.constant 0 : index
    %22 = vector.load %arg5[%c0_21, %c0_22] : memref<2x64xbf16, #tpu.memory_space<vmem>>, vector<2x64xbf16>
    %c1_23 = arith.constant 1 : index
    %c0_24 = arith.constant 0 : index
    %c0_25 = arith.constant 0 : index
    %23 = vector.load %arg2[%c1_23, %c0_24, %c0_25] : memref<2x64x128xbf16, #tpu.memory_space<vmem>>, vector<1x64x128xbf16>
    %24 = vector.shape_cast %23 : vector<1x64x128xbf16> to vector<64x128xbf16>
    %cst_26 = arith.constant dense<0.000000e+00> : vector<2x128xf32>
    %25 = tpu.matmul %22, %24, %cst_26 {dimension_numbers = #tpu.dot_dimension_numbers<[1], [0], [0], [1], [0, 0, 1, 1], [], []>} : vector<2x64xbf16>, vector<64x128xbf16>, vector<2x128xf32> -> vector<2x128xf32>
    %26 = vector.extract_strided_slice %25 {offsets = [0, 0], sizes = [1, 128], strides = [1, 1]} : vector<2x128xf32> to vector<1x128xf32>
    %27 = vector.extract_strided_slice %25 {offsets = [1, 0], sizes = [1, 128], strides = [1, 1]} : vector<2x128xf32> to vector<1x128xf32>
    %28 = arith.addf %26, %27 : vector<1x128xf32>
    %c0_27 = arith.constant 0 : index
    %c0_28 = arith.constant 0 : index
    %29 = vector.load %arg6[%c0_27, %c0_28] : memref<2x16xbf16, #tpu.memory_space<vmem>>, vector<2x16xbf16>
    %c1_29 = arith.constant 1 : index
    %c0_30 = arith.constant 0 : index
    %c0_31 = arith.constant 0 : index
    %30 = vector.load %arg3[%c1_29, %c0_30, %c0_31] : memref<2x16x256xbf16, #tpu.memory_space<vmem>>, vector<1x16x256xbf16>
    %31 = vector.shape_cast %30 : vector<1x16x256xbf16> to vector<16x256xbf16>
    %cst_32 = arith.constant dense<0.000000e+00> : vector<2x256xf32>
    %32 = tpu.matmul %29, %31, %cst_32 {dimension_numbers = #tpu.dot_dimension_numbers<[1], [0], [0], [1], [0, 0, 1, 1], [], []>} : vector<2x16xbf16>, vector<16x256xbf16>, vector<2x256xf32> -> vector<2x256xf32>
    %33 = vector.extract_strided_slice %32 {offsets = [0, 0], sizes = [1, 256], strides = [1, 1]} : vector<2x256xf32> to vector<1x256xf32>
    %34 = vector.extract_strided_slice %32 {offsets = [1, 0], sizes = [1, 256], strides = [1, 1]} : vector<2x256xf32> to vector<1x256xf32>
    %35 = arith.addf %33, %34 : vector<1x256xf32>
    %36 = tpu.concatenate %3, %21 in 0 : vector<1x64xf32>, vector<1x64xf32> -> vector<2x64xf32>
    %cst_33 = arith.constant 3.906250e-03 : f32
    %37 = vector.broadcast %cst_33 : f32 to vector<2x64xf32>
    %38 = arith.mulf %36, %37 : vector<2x64xf32>
    %39 = tpu.concatenate %10, %28 in 0 : vector<1x128xf32>, vector<1x128xf32> -> vector<2x128xf32>
    %40 = tpu.concatenate %17, %35 in 0 : vector<1x256xf32>, vector<1x256xf32> -> vector<2x256xf32>
    %41 = arith.truncf %38 : vector<2x64xf32> to vector<2x64xbf16>
    %c0_34 = arith.constant 0 : index
    %c0_35 = arith.constant 0 : index
    %42 = vector.load %arg7[%c0_34, %c0_35] : memref<64x128xbf16, #tpu.memory_space<vmem>>, vector<64x128xbf16>
    %cst_36 = arith.constant dense<0.000000e+00> : vector<2x128xf32>
    %43 = tpu.matmul %41, %42, %cst_36 {dimension_numbers = #tpu.dot_dimension_numbers<[1], [0], [0], [1], [0, 0, 1, 1], [], []>} : vector<2x64xbf16>, vector<64x128xbf16>, vector<2x128xf32> -> vector<2x128xf32>
    %44 = arith.truncf %39 : vector<2x128xf32> to vector<2x128xbf16>
    %c0_37 = arith.constant 0 : index
    %c0_38 = arith.constant 0 : index
    %45 = vector.load %arg8[%c0_37, %c0_38] : memref<128x128xbf16, #tpu.memory_space<vmem>>, vector<128x128xbf16>
    %cst_39 = arith.constant dense<0.000000e+00> : vector<2x128xf32>
    %46 = tpu.matmul %44, %45, %cst_39 {dimension_numbers = #tpu.dot_dimension_numbers<[1], [0], [0], [1], [0, 0, 1, 1], [], []>} : vector<2x128xbf16>, vector<128x128xbf16>, vector<2x128xf32> -> vector<2x128xf32>
    %47 = arith.truncf %40 : vector<2x256xf32> to vector<2x256xbf16>
    %c0_40 = arith.constant 0 : index
    %c0_41 = arith.constant 0 : index
    %48 = vector.load %arg9[%c0_40, %c0_41] : memref<256x128xbf16, #tpu.memory_space<vmem>>, vector<256x128xbf16>
    %cst_42 = arith.constant dense<0.000000e+00> : vector<2x128xf32>
    %49 = tpu.matmul %47, %48, %cst_42 {dimension_numbers = #tpu.dot_dimension_numbers<[1], [0], [0], [1], [0, 0, 1, 1], [], []>} : vector<2x256xbf16>, vector<256x128xbf16>, vector<2x128xf32> -> vector<2x128xf32>
    %50 = arith.truncf %43 : vector<2x128xf32> to vector<2x128xbf16>
    %c0_43 = arith.constant 0 : index
    %c0_44 = arith.constant 0 : index
    %51 = vector.load %arg10[%c0_43, %c0_44] : memref<128x128xbf16, #tpu.memory_space<vmem>>, vector<128x128xbf16>
    %cst_45 = arith.constant dense<0.000000e+00> : vector<2x128xf32>
    %52 = tpu.matmul %50, %51, %cst_45 {dimension_numbers = #tpu.dot_dimension_numbers<[1], [0], [0], [1], [0, 0, 1, 1], [], []>} : vector<2x128xbf16>, vector<128x128xbf16>, vector<2x128xf32> -> vector<2x128xf32>
    %53 = arith.truncf %46 : vector<2x128xf32> to vector<2x128xbf16>
    %c0_46 = arith.constant 0 : index
    %c0_47 = arith.constant 0 : index
    %54 = vector.load %arg11[%c0_46, %c0_47] : memref<128x128xbf16, #tpu.memory_space<vmem>>, vector<128x128xbf16>
    %cst_48 = arith.constant dense<0.000000e+00> : vector<2x128xf32>
    %55 = tpu.matmul %53, %54, %cst_48 {dimension_numbers = #tpu.dot_dimension_numbers<[1], [0], [0], [1], [0, 0, 1, 1], [], []>} : vector<2x128xbf16>, vector<128x128xbf16>, vector<2x128xf32> -> vector<2x128xf32>
    %56 = arith.addf %52, %55 : vector<2x128xf32>
    %57 = arith.truncf %49 : vector<2x128xf32> to vector<2x128xbf16>
    %c0_49 = arith.constant 0 : index
    %c0_50 = arith.constant 0 : index
    %58 = vector.load %arg12[%c0_49, %c0_50] : memref<128x128xbf16, #tpu.memory_space<vmem>>, vector<128x128xbf16>
    %cst_51 = arith.constant dense<0.000000e+00> : vector<2x128xf32>
    %59 = tpu.matmul %57, %58, %cst_51 {dimension_numbers = #tpu.dot_dimension_numbers<[1], [0], [0], [1], [0, 0, 1, 1], [], []>} : vector<2x128xbf16>, vector<128x128xbf16>, vector<2x128xf32> -> vector<2x128xf32>
    %60 = arith.addf %56, %59 : vector<2x128xf32>
    %cst_52 = arith.constant 0.000000e+00 : f32
    %61 = vector.broadcast %cst_52 : f32 to vector<2x128xf32>
    %62 = arith.maximumf %60, %61 : vector<2x128xf32>
    %63 = arith.truncf %62 : vector<2x128xf32> to vector<2x128xbf16>
    %c0_53 = arith.constant 0 : index
    %c0_54 = arith.constant 0 : index
    %64 = vector.load %arg13[%c0_53, %c0_54] : memref<128x128xbf16, #tpu.memory_space<vmem>>, vector<128x128xbf16>
    %cst_55 = arith.constant dense<0.000000e+00> : vector<2x128xf32>
    %65 = tpu.matmul %63, %64, %cst_55 {dimension_numbers = #tpu.dot_dimension_numbers<[1], [0], [0], [1], [0, 0, 1, 1], [], []>} : vector<2x128xbf16>, vector<128x128xbf16>, vector<2x128xf32> -> vector<2x128xf32>
    %cst_56 = arith.constant 0.000000e+00 : f32
    %66 = vector.broadcast %cst_56 : f32 to vector<2x128xf32>
    %67 = arith.subf %66, %65 : vector<2x128xf32>
    %68 = math.exp %67 : vector<2x128xf32>
    %cst_57 = arith.constant 1.000000e+00 : f32
    %69 = vector.broadcast %cst_57 : f32 to vector<2x128xf32>
    %70 = arith.addf %69, %68 : vector<2x128xf32>
    %cst_58 = arith.constant 1.000000e+00 : f32
    %71 = vector.broadcast %cst_58 : f32 to vector<2x128xf32>
    %72 = arith.divf %71, %70 : vector<2x128xf32>
    %73 = vector.extract_strided_slice %72 {offsets = [0, 0], sizes = [2, 1], strides = [1, 1]} : vector<2x128xf32> to vector<2x1xf32>
    %74 = vector.broadcast %73 : vector<2x1xf32> to vector<2x128xf32>
    %75 = arith.mulf %74, %43 : vector<2x128xf32>
    %76 = vector.extract_strided_slice %72 {offsets = [0, 1], sizes = [2, 1], strides = [1, 1]} : vector<2x128xf32> to vector<2x1xf32>
    %77 = vector.broadcast %76 : vector<2x1xf32> to vector<2x128xf32>
    %78 = arith.mulf %77, %46 : vector<2x128xf32>
    %79 = arith.addf %75, %78 : vector<2x128xf32>
    %80 = vector.extract_strided_slice %72 {offsets = [0, 2], sizes = [2, 1], strides = [1, 1]} : vector<2x128xf32> to vector<2x1xf32>
    %81 = vector.broadcast %80 : vector<2x1xf32> to vector<2x128xf32>
    %82 = arith.mulf %81, %49 : vector<2x128xf32>
    %83 = arith.addf %79, %82 : vector<2x128xf32>
    %84 = arith.truncf %83 : vector<2x128xf32> to vector<2x128xbf16>
    %c0_59 = arith.constant 0 : index
    %c0_60 = arith.constant 0 : index
    %85 = vector.load %arg14[%c0_59, %c0_60] : memref<128x128xbf16, #tpu.memory_space<vmem>>, vector<128x128xbf16>
    %cst_61 = arith.constant dense<0.000000e+00> : vector<2x128xf32>
    %86 = tpu.matmul %84, %85, %cst_61 {dimension_numbers = #tpu.dot_dimension_numbers<[1], [0], [0], [1], [0, 0, 1, 1], [], []>} : vector<2x128xbf16>, vector<128x128xbf16>, vector<2x128xf32> -> vector<2x128xf32>
    %cst_62 = arith.constant 0.000000e+00 : f32
    %87 = vector.broadcast %cst_62 : f32 to vector<2x128xf32>
    %88 = arith.maximumf %86, %87 : vector<2x128xf32>
    %89 = arith.truncf %88 : vector<2x128xf32> to vector<2x128xbf16>
    %c0_63 = arith.constant 0 : index
    %c0_64 = arith.constant 0 : index
    %90 = vector.load %arg15[%c0_63, %c0_64] : memref<128x128xbf16, #tpu.memory_space<vmem>>, vector<128x128xbf16>
    %cst_65 = arith.constant dense<0.000000e+00> : vector<2x128xf32>
    %91 = tpu.matmul %89, %90, %cst_65 {dimension_numbers = #tpu.dot_dimension_numbers<[1], [0], [0], [1], [0, 0, 1, 1], [], []>} : vector<2x128xbf16>, vector<128x128xbf16>, vector<2x128xf32> -> vector<2x128xf32>
    %cst_66 = arith.constant 0.000000e+00 : f32
    %92 = vector.broadcast %cst_66 : f32 to vector<2x128xf32>
    %93 = arith.subf %92, %91 : vector<2x128xf32>
    %94 = math.exp %93 : vector<2x128xf32>
    %cst_67 = arith.constant 1.000000e+00 : f32
    %95 = vector.broadcast %cst_67 : f32 to vector<2x128xf32>
    %96 = arith.addf %95, %94 : vector<2x128xf32>
    %cst_68 = arith.constant 1.000000e+00 : f32
    %97 = vector.broadcast %cst_68 : f32 to vector<2x128xf32>
    %98 = arith.divf %97, %96 : vector<2x128xf32>
    %99 = arith.mulf %83, %98 : vector<2x128xf32>
    %100 = arith.truncf %99 : vector<2x128xf32> to vector<2x128xbf16>
    %c0_69 = arith.constant 0 : index
    %c0_70 = arith.constant 0 : index
    %101 = vector.load %arg16[%c0_69, %c0_70] : memref<128x128xbf16, #tpu.memory_space<vmem>>, vector<128x128xbf16>
    %cst_71 = arith.constant dense<0.000000e+00> : vector<2x128xf32>
    %102 = tpu.matmul %100, %101, %cst_71 {dimension_numbers = #tpu.dot_dimension_numbers<[1], [0], [0], [1], [0, 0, 1, 1], [], []>} : vector<2x128xbf16>, vector<128x128xbf16>, vector<2x128xf32> -> vector<2x128xf32>
    %c0_72 = arith.constant 0 : index
    %c0_73 = arith.constant 0 : index
    %103 = vector.load %arg17[%c0_72, %c0_73] : memref<1x128xf32, #tpu.memory_space<vmem>>, vector<1x128xf32>
    %104 = vector.broadcast %103 : vector<1x128xf32> to vector<2x128xf32>
    %105 = arith.addf %102, %104 : vector<2x128xf32>
    %c0_74 = arith.constant 0 : index
    %c0_75 = arith.constant 0 : index
    %c0_76 = arith.constant 0 : index
    %106 = vector.load %arg18[%c0_74, %c0_75, %c0_76] : memref<1x2x128xf32, #tpu.memory_space<vmem>>, vector<1x2x128xf32>
    %107 = vector.shape_cast %106 : vector<1x2x128xf32> to vector<2x128xf32>
    %108 = vector.shape_cast %105 : vector<2x128xf32> to vector<1x2x128xf32>
    tpu.vector_store %arg18[%c0_74, %c0_75, %c0_76], %108 {strides = array<i32>} : memref<1x2x128xf32, #tpu.memory_space<vmem>>, vector<1x2x128xf32>,
    return
  }
  func.func @transform_0(%arg0: i32) -> (i32, i32, i32) {
    %c0_i32 = arith.constant 0 : i32
    %c0_i32_0 = arith.constant 0 : i32
    %c0_i32_1 = arith.constant 0 : i32
    return %arg0, %c0_i32, %c0_i32_0 : i32, i32, i32
  }
  func.func @transform_1(%arg0: i32) -> (i32, i32, i32) {
    %c0_i32 = arith.constant 0 : i32
    %c0_i32_0 = arith.constant 0 : i32
    %c0_i32_1 = arith.constant 0 : i32
    return %arg0, %c0_i32, %c0_i32_0 : i32, i32, i32
  }
  func.func @transform_2(%arg0: i32) -> (i32, i32, i32) {
    %c0_i32 = arith.constant 0 : i32
    %c0_i32_0 = arith.constant 0 : i32
    %c0_i32_1 = arith.constant 0 : i32
    return %arg0, %c0_i32, %c0_i32_0 : i32, i32, i32
  }
  func.func @transform_3(%arg0: i32) -> (i32, i32) {
    %c0_i32 = arith.constant 0 : i32
    %c0_i32_0 = arith.constant 0 : i32
    %c0_i32_1 = arith.constant 0 : i32
    return %c0_i32, %c0_i32_0 : i32, i32
  }
  func.func @transform_4(%arg0: i32) -> (i32, i32) {
    %c0_i32 = arith.constant 0 : i32
    %c0_i32_0 = arith.constant 0 : i32
    %c0_i32_1 = arith.constant 0 : i32
    return %c0_i32, %c0_i32_0 : i32, i32
  }
  func.func @transform_5(%arg0: i32) -> (i32, i32) {
    %c0_i32 = arith.constant 0 : i32
    %c0_i32_0 = arith.constant 0 : i32
    %c0_i32_1 = arith.constant 0 : i32
    return %c0_i32, %c0_i32_0 : i32, i32
  }
  func.func @transform_6(%arg0: i32) -> (i32, i32) {
    %c0_i32 = arith.constant 0 : i32
    %c0_i32_0 = arith.constant 0 : i32
    %c0_i32_1 = arith.constant 0 : i32
    return %c0_i32, %c0_i32_0 : i32, i32
  }
  func.func @transform_7(%arg0: i32) -> (i32, i32) {
    %c0_i32 = arith.constant 0 : i32
    %c0_i32_0 = arith.constant 0 : i32
    %c0_i32_1 = arith.constant 0 : i32
    return %c0_i32, %c0_i32_0 : i32, i32
  }
  func.func @transform_8(%arg0: i32) -> (i32, i32) {
    %c0_i32 = arith.constant 0 : i32
    %c0_i32_0 = arith.constant 0 : i32
    %c0_i32_1 = arith.constant 0 : i32
    return %c0_i32, %c0_i32_0 : i32, i32
  }
  func.func @transform_9(%arg0: i32) -> (i32, i32) {
    %c0_i32 = arith.constant 0 : i32
    %c0_i32_0 = arith.constant 0 : i32
    %c0_i32_1 = arith.constant 0 : i32
    return %c0_i32, %c0_i32_0 : i32, i32
  }
  func.func @transform_10(%arg0: i32) -> (i32, i32) {
    %c0_i32 = arith.constant 0 : i32
    %c0_i32_0 = arith.constant 0 : i32
    %c0_i32_1 = arith.constant 0 : i32
    return %c0_i32, %c0_i32_0 : i32, i32
  }
  func.func @transform_11(%arg0: i32) -> (i32, i32) {
    %c0_i32 = arith.constant 0 : i32
    %c0_i32_0 = arith.constant 0 : i32
    %c0_i32_1 = arith.constant 0 : i32
    return %c0_i32, %c0_i32_0 : i32, i32
  }
  func.func @transform_12(%arg0: i32) -> (i32, i32) {
    %c0_i32 = arith.constant 0 : i32
    %c0_i32_0 = arith.constant 0 : i32
    %c0_i32_1 = arith.constant 0 : i32
    return %c0_i32, %c0_i32_0 : i32, i32
  }
  func.func @transform_13(%arg0: i32) -> (i32, i32) {
    %c0_i32 = arith.constant 0 : i32
    %c0_i32_0 = arith.constant 0 : i32
    %c0_i32_1 = arith.constant 0 : i32
    return %c0_i32, %c0_i32_0 : i32, i32
  }
  func.func @transform_14(%arg0: i32) -> (i32, i32) {
    %c0_i32 = arith.constant 0 : i32
    %c0_i32_0 = arith.constant 0 : i32
    %c0_i32_1 = arith.constant 0 : i32
    return %c0_i32, %c0_i32_0 : i32, i32
  }
  func.func @transform_15(%arg0: i32) -> (i32, i32) {
    %c0_i32 = arith.constant 0 : i32
    %c0_i32_0 = arith.constant 0 : i32
    %c0_i32_1 = arith.constant 0 : i32
    return %c0_i32, %c0_i32_0 : i32, i32
  }
  func.func @transform_16(%arg0: i32) -> (i32, i32) {
    %c0_i32 = arith.constant 0 : i32
    %c0_i32_0 = arith.constant 0 : i32
    %c0_i32_1 = arith.constant 0 : i32
    return %c0_i32, %c0_i32_0 : i32, i32
  }
  func.func @transform_17(%arg0: i32) -> (i32, i32, i32) {
    %c0_i32 = arith.constant 0 : i32
    %c0_i32_0 = arith.constant 0 : i32
    %c0_i32_1 = arith.constant 0 : i32
    return %arg0, %c0_i32, %c0_i32_0 : i32, i32, i32
  }
}

</mosaic_0001>

<llo_original>
// kernel: tpu_custom_call.1
$region0: #{tpu_custom_call.1}
  #allocation0 [shape = 'u32[]', space=smem, size = 0x4, offset = 0x4, fixed_abs, tag = 'smem constant byte address 0x4 - core index']
  #allocation1 [shape = 'u32[144,128]{1,0:T(1,128)}', space=vmem, size = 0x12000, scoped, tag = 'internal scratch']
  %s0 = inlined_call_operand.vmem [shape: bf16[4,256,64], index: 0, kind: input, shape index: {}]
  %s1 = inlined_call_operand.vmem [shape: bf16[4,64,128], index: 1, kind: input, shape index: {}]
  %s2 = inlined_call_operand.vmem [shape: bf16[4,16,256], index: 2, kind: input, shape index: {}]
  %s3 = inlined_call_operand.vmem [shape: bf16[1,256], index: 3, kind: input, shape index: {}]
  %s4 = inlined_call_operand.vmem [shape: bf16[2,64], index: 4, kind: input, shape index: {}]
  %s5 = inlined_call_operand.vmem [shape: bf16[2,16], index: 5, kind: input, shape index: {}]
  %s6 = inlined_call_operand.hbm [shape: bf16[64,128], index: 6, kind: input, shape index: {}]
  %s7 = inlined_call_operand.vmem [shape: bf16[128,128], index: 7, kind: input, shape index: {}]
  %s8 = inlined_call_operand.vmem [shape: bf16[256,128], index: 8, kind: input, shape index: {}]
  %s9 = inlined_call_operand.vmem [shape: bf16[128,128], index: 9, kind: input, shape index: {}]
  %s10 = inlined_call_operand.vmem [shape: bf16[128,128], index: 10, kind: input, shape index: {}]
  %s11 = inlined_call_operand.vmem [shape: bf16[128,128], index: 11, kind: input, shape index: {}]
  %s12 = inlined_call_operand.vmem [shape: bf16[128,128], index: 12, kind: input, shape index: {}]
  %s13 = inlined_call_operand.vmem [shape: bf16[128,128], index: 13, kind: input, shape index: {}]
  %s14 = inlined_call_operand.vmem [shape: bf16[128,128], index: 14, kind: input, shape index: {}]
  %s15 = inlined_call_operand.hbm [shape: bf16[128,128], index: 15, kind: input, shape index: {}]
  %s16 = inlined_call_operand.vmem [shape: f32[1,128], index: 16, kind: input, shape index: {}]
  %s17 = inlined_call_operand.hbm [shape: f32[2,2,128], index: 17, kind: output, shape index: {}]
  %s18 = sld [smem:[#allocation0]]
  $region109: #{tpu_custom_call.1} parent=0
    _
  %s20 = ssub.s32 1, %s18
  %s21 = scalar_select 0, %s20, %s18
  $region1: #{tpu_custom_call.1} parent=0
    #allocation2 [shape = 'u8[16384]{0}', space=vmem, size = 0x4000, scoped, tag = 'input window, operand 6, single buffered']
    #allocation3 [shape = 's32[2]{0}', space=sflag, size = 0x8, scoped, tag = 'scoped memory for tpu_custom_call.1']
    #allocation4 [shape = 's32[2]{0}', space=sflag, size = 0x8, scoped, tag = 'scoped memory for tpu_custom_call.1']
    #allocation5 [shape = 'u8[32768]{0}', space=vmem, size = 0x8000, scoped, tag = 'input window, operand 15, single buffered']
    #allocation6 [shape = 's32[1]{0}', space=sflag, size = 0x4, scoped, tag = 'scoped memory for tpu_custom_call.1']
    #allocation7 [shape = 'u8[2048]{0}', space=vmem, size = 0x800, scoped, tag = 'output window, operand 0']
    %22 = vsyncpa [#allocation3], 0
    %23 = vsyncpa [#allocation6], 0
    %24 = vsyncpa [#allocation4], 0
    %s25 = scalar_lea.sflag [#allocation4], 1
    %26 = vsyncpa %s25, 0
    loop: start=0, step=1, limit=4
    $region2: #{tpu_custom_call.1} parent=1 // loop_pre_header
      _
    $region3: #{tpu_custom_call.1} parent=1 // loop_header
      %s28 = sphi 0, %s32
      %p29 = scmp.ge.s32.totalorder %s28, 4
      %s38 = sphi 0, %s40
      %s41 = sphi 0, %s38
      %s42 = sphi 0, %s41
      %s58 = sphi 0, %s42
      %s64 = sphi 0, %s66
      %s67 = sphi 0, %s64
      %s68 = sphi 0, %s67
      %s84 = sphi 0, %s68
      %s90 = sphi 0, %s92
      %s93 = sphi 0, %s90
      %s94 = sphi 0, %s93
      %s110 = sphi 0, %s94
      %s114 = sphi 0, %s114
      %s116 = sphi 0, %s114
      %s117 = sphi 0, %s116
      %s131 = sphi 0, %s117
      %s135 = sphi 0, %s135
      %s137 = sphi 0, %s135
      %s138 = sphi 0, %s137
      %s152 = sphi 0, %s138
      %s156 = sphi 0, %s156
      %s158 = sphi 0, %s156
      %s159 = sphi 0, %s158
      %s173 = sphi 0, %s159
      %s177 = sphi 0, %s177
      %s179 = sphi 0, %s177
      %s180 = sphi 0, %s179
      %s194 = sphi 0, %s180
      %s198 = sphi 0, %s198
      %s200 = sphi 0, %s198
      %s201 = sphi 0, %s200
      %s215 = sphi 0, %s201
      %s219 = sphi 0, %s219
      %s221 = sphi 0, %s219
      %s222 = sphi 0, %s221
      %s236 = sphi 0, %s222
      %s240 = sphi 0, %s240
      %s242 = sphi 0, %s240
      %s243 = sphi 0, %s242
      %s257 = sphi 0, %s243
      %s261 = sphi 0, %s261
      %s263 = sphi 0, %s261
      %s264 = sphi 0, %s263
      %s278 = sphi 0, %s264
      %s282 = sphi 0, %s282
      %s284 = sphi 0, %s282
      %s285 = sphi 0, %s284
      %s299 = sphi 0, %s285
      %s303 = sphi 0, %s303
      %s305 = sphi 0, %s303
      %s306 = sphi 0, %s305
      %s320 = sphi 0, %s306
      %s324 = sphi 0, %s324
      %s326 = sphi 0, %s324
      %s327 = sphi 0, %s326
      %s341 = sphi 0, %s327
      %s345 = sphi 0, %s345
      %s347 = sphi 0, %s345
      %s348 = sphi 0, %s347
      %s362 = sphi 0, %s348
      %s366 = sphi 0, %s366
      %s368 = sphi 0, %s366
      %s369 = sphi 0, %s368
      %s383 = sphi 0, %s369
      %s387 = sphi 0, %s387
      %s389 = sphi 0, %s387
      %s390 = sphi 0, %s389
      %s404 = sphi 0, %s390
      %s410 = sphi 0, %s412
      %s413 = sphi 0, %s410
      %s414 = sphi 0, %s413
      %s430 = sphi 0, %s414
    $region4: #{tpu_custom_call.1} parent=1 // loop_header_branch
      %31 = sbr.rel (%p29) target = $region8
    $region5: #{tpu_custom_call.1} parent=1 // loop_body
      %s33 = ssub.s32 %s28, 1
      %s34 = ssub.s32 %s28, 2
      %s35 = sadd.s32 %s28, 1
      %s36 = ssub.s32 %s28, %s35
      %p37 = scmp.eq.s32.totalorder %s36, 0
      %s39 = sadd.s32 %s38, 1
      %s40 = scalar_select %p37, %s38, %s39
      %p43 = pneg %p37
      %p44 = scmp.eq.s32.totalorder %s28, 1
      %p45 = por %p43, %p44
      %p46 = scmp.ne.s32.totalorder %s38, %s41
      %p47 = scmp.eq.s32.totalorder %s28, 0
      %p48 = por %p46, %p47
      %p49 = scmp.ne.s32.totalorder %s38, %s41
      %p50 = scmp.eq.s32.totalorder %s33, 1
      %p51 = por %p49, %p50
      %p52 = scmp.ne.s32.totalorder %s41, %s42
      %p53 = scmp.eq.s32.totalorder %s33, 0
      %p54 = por %p52, %p53
      %p55 = scmp.ne.s32.totalorder %s41, %s42
      %p56 = scmp.eq.s32.totalorder %s34, 1
      %p57 = por %p55, %p56
      %p59 = scmp.ne.s32.totalorder %s42, %s58
      %p60 = scmp.eq.s32.totalorder %s34, 0
      %p61 = por %p59, %p60
      %s62 = ssub.s32 %s28, %s35
      %p63 = scmp.eq.s32.totalorder %s62, 0
      %s65 = sadd.s32 %s64, 1
      %s66 = scalar_select %p63, %s64, %s65
      %p69 = pneg %p63
      %p70 = scmp.eq.s32.totalorder %s28, 1
      %p71 = por %p69, %p70
      %p72 = scmp.ne.s32.totalorder %s64, %s67
      %p73 = scmp.eq.s32.totalorder %s28, 0
      %p74 = por %p72, %p73
      %p75 = scmp.ne.s32.totalorder %s64, %s67
      %p76 = scmp.eq.s32.totalorder %s33, 1
      %p77 = por %p75, %p76
      %p78 = scmp.ne.s32.totalorder %s67, %s68
      %p79 = scmp.eq.s32.totalorder %s33, 0
      %p80 = por %p78, %p79
      %p81 = scmp.ne.s32.totalorder %s67, %s68
      %p82 = scmp.eq.s32.totalorder %s34, 1
      %p83 = por %p81, %p82
      %p85 = scmp.ne.s32.totalorder %s68, %s84
      %p86 = scmp.eq.s32.totalorder %s34, 0
      %p87 = por %p85, %p86
      %s88 = ssub.s32 %s28, %s35
      %p89 = scmp.eq.s32.totalorder %s88, 0
      %s91 = sadd.s32 %s90, 1
      %s92 = scalar_select %p89, %s90, %s91
      %p95 = pneg %p89
      %p96 = scmp.eq.s32.totalorder %s28, 1
      %p97 = por %p95, %p96
      %p98 = scmp.ne.s32.totalorder %s90, %s93
      %p99 = scmp.eq.s32.totalorder %s28, 0
      %p100 = por %p98, %p99
      %p101 = scmp.ne.s32.totalorder %s90, %s93
      %p102 = scmp.eq.s32.totalorder %s33, 1
      %p103 = por %p101, %p102
      %p104 = scmp.ne.s32.totalorder %s93, %s94
      %p105 = scmp.eq.s32.totalorder %s33, 0
      %p106 = por %p104, %p105
      %p107 = scmp.ne.s32.totalorder %s93, %s94
      %p108 = scmp.eq.s32.totalorder %s34, 1
      %p109 = por %p107, %p108
      %p111 = scmp.ne.s32.totalorder %s94, %s110
      %p112 = scmp.eq.s32.totalorder %s34, 0
      %p113 = por %p111, %p112
      %s115 = sadd.s32 %s114, 1
      %p118 = scmp.eq.s32.totalorder %s28, 1
      %p119 = scmp.ne.s32.totalorder %s114, %s116
      %p120 = scmp.eq.s32.totalorder %s28, 0
      %p121 = por %p119, %p120
      %p122 = scmp.ne.s32.totalorder %s114, %s116
      %p123 = scmp.eq.s32.totalorder %s33, 1
      %p124 = por %p122, %p123
      %p125 = scmp.ne.s32.totalorder %s116, %s117
      %p126 = scmp.eq.s32.totalorder %s33, 0
      %p127 = por %p125, %p126
      %p128 = scmp.ne.s32.totalorder %s116, %s117
      %p129 = scmp.eq.s32.totalorder %s34, 1
      %p130 = por %p128, %p129
      %p132 = scmp.ne.s32.totalorder %s117, %s131
      %p133 = scmp.eq.s32.totalorder %s34, 0
      %p134 = por %p132, %p133
      %s136 = sadd.s32 %s135, 1
      %p139 = scmp.eq.s32.totalorder %s28, 1
      %p140 = scmp.ne.s32.totalorder %s135, %s137
      %p141 = scmp.eq.s32.totalorder %s28, 0
      %p142 = por %p140, %p141
      %p143 = scmp.ne.s32.totalorder %s135, %s137
      %p144 = scmp.eq.s32.totalorder %s33, 1
      %p145 = por %p143, %p144
      %p146 = scmp.ne.s32.totalorder %s137, %s138
      %p147 = scmp.eq.s32.totalorder %s33, 0
      %p148 = por %p146, %p147
      %p149 = scmp.ne.s32.totalorder %s137, %s138
      %p150 = scmp.eq.s32.totalorder %s34, 1
      %p151 = por %p149, %p150
      %p153 = scmp.ne.s32.totalorder %s138, %s152
      %p154 = scmp.eq.s32.totalorder %s34, 0
      %p155 = por %p153, %p154
      %s157 = sadd.s32 %s156, 1
      %p160 = scmp.eq.s32.totalorder %s28, 1
      %p161 = scmp.ne.s32.totalorder %s156, %s158
      %p162 = scmp.eq.s32.totalorder %s28, 0
      %p163 = por %p161, %p162
      %p164 = scmp.ne.s32.totalorder %s156, %s158
      %p165 = scmp.eq.s32.totalorder %s33, 1
      %p166 = por %p164, %p165
      %p167 = scmp.ne.s32.totalorder %s158, %s159
      %p168 = scmp.eq.s32.totalorder %s33, 0
      %p169 = por %p167, %p168
      %p170 = scmp.ne.s32.totalorder %s158, %s159
      %p171 = scmp.eq.s32.totalorder %s34, 1
      %p172 = por %p170, %p171
      %p174 = scmp.ne.s32.totalorder %s159, %s173
      %p175 = scmp.eq.s32.totalorder %s34, 0
      %p176 = por %p174, %p175
      %s178 = sadd.s32 %s177, 1
      %p181 = scmp.eq.s32.totalorder %s28, 1
      %p182 = scmp.ne.s32.totalorder %s177, %s179
      %p183 = scmp.eq.s32.totalorder %s28, 0
      %p184 = por %p182, %p183
      %p185 = scmp.ne.s32.totalorder %s177, %s179
      %p186 = scmp.eq.s32.totalorder %s33, 1
      %p187 = por %p185, %p186
      %p188 = scmp.ne.s32.totalorder %s179, %s180
      %p189 = scmp.eq.s32.totalorder %s33, 0
      %p190 = por %p188, %p189
      %p191 = scmp.ne.s32.totalorder %s179, %s180
      %p192 = scmp.eq.s32.totalorder %s34, 1
      %p193 = por %p191, %p192
      %p195 = scmp.ne.s32.totalorder %s180, %s194
      %p196 = scmp.eq.s32.totalorder %s34, 0
      %p197 = por %p195, %p196
      %s199 = sadd.s32 %s198, 1
      %p202 = scmp.eq.s32.totalorder %s28, 1
      %p203 = scmp.ne.s32.totalorder %s198, %s200
      %p204 = scmp.eq.s32.totalorder %s28, 0
      %p205 = por %p203, %p204
      %p206 = scmp.ne.s32.totalorder %s198, %s200
      %p207 = scmp.eq.s32.totalorder %s33, 1
      %p208 = por %p206, %p207
      %p209 = scmp.ne.s32.totalorder %s200, %s201
      %p210 = scmp.eq.s32.totalorder %s33, 0
      %p211 = por %p209, %p210
      %p212 = scmp.ne.s32.totalorder %s200, %s201
      %p213 = scmp.eq.s32.totalorder %s34, 1
      %p214 = por %p212, %p213
      %p216 = scmp.ne.s32.totalorder %s201, %s215
      %p217 = scmp.eq.s32.totalorder %s34, 0
      %p218 = por %p216, %p217
      %s220 = sadd.s32 %s219, 1
      %p223 = scmp.eq.s32.totalorder %s28, 1
      %p224 = scmp.ne.s32.totalorder %s219, %s221
      %p225 = scmp.eq.s32.totalorder %s28, 0
      %p226 = por %p224, %p225
      %p227 = scmp.ne.s32.totalorder %s219, %s221
      %p228 = scmp.eq.s32.totalorder %s33, 1
      %p229 = por %p227, %p228
      %p230 = scmp.ne.s32.totalorder %s221, %s222
      %p231 = scmp.eq.s32.totalorder %s33, 0
      %p232 = por %p230, %p231
      %p233 = scmp.ne.s32.totalorder %s221, %s222
      %p234 = scmp.eq.s32.totalorder %s34, 1
      %p235 = por %p233, %p234
      %p237 = scmp.ne.s32.totalorder %s222, %s236
      %p238 = scmp.eq.s32.totalorder %s34, 0
      %p239 = por %p237, %p238
      %s241 = sadd.s32 %s240, 1
      %p244 = scmp.eq.s32.totalorder %s28, 1
      %p245 = scmp.ne.s32.totalorder %s240, %s242
      %p246 = scmp.eq.s32.totalorder %s28, 0
      %p247 = por %p245, %p246
      %p248 = scmp.ne.s32.totalorder %s240, %s242
      %p249 = scmp.eq.s32.totalorder %s33, 1
      %p250 = por %p248, %p249
      %p251 = scmp.ne.s32.totalorder %s242, %s243
      %p252 = scmp.eq.s32.totalorder %s33, 0
      %p253 = por %p251, %p252
      %p254 = scmp.ne.s32.totalorder %s242, %s243
      %p255 = scmp.eq.s32.totalorder %s34, 1
      %p256 = por %p254, %p255
      %p258 = scmp.ne.s32.totalorder %s243, %s257
      %p259 = scmp.eq.s32.totalorder %s34, 0
      %p260 = por %p258, %p259
      %s262 = sadd.s32 %s261, 1
      %p265 = scmp.eq.s32.totalorder %s28, 1
      %p266 = scmp.ne.s32.totalorder %s261, %s263
      %p267 = scmp.eq.s32.totalorder %s28, 0
      %p268 = por %p266, %p267
      %p269 = scmp.ne.s32.totalorder %s261, %s263
      %p270 = scmp.eq.s32.totalorder %s33, 1
      %p271 = por %p269, %p270
      %p272 = scmp.ne.s32.totalorder %s263, %s264
      %p273 = scmp.eq.s32.totalorder %s33, 0
      %p274 = por %p272, %p273
      %p275 = scmp.ne.s32.totalorder %s263, %s264
      %p276 = scmp.eq.s32.totalorder %s34, 1
      %p277 = por %p275, %p276
      %p279 = scmp.ne.s32.totalorder %s264, %s278
      %p280 = scmp.eq.s32.totalorder %s34, 0
      %p281 = por %p279, %p280
      %s283 = sadd.s32 %s282, 1
      %p286 = scmp.eq.s32.totalorder %s28, 1
      %p287 = scmp.ne.s32.totalorder %s282, %s284
      %p288 = scmp.eq.s32.totalorder %s28, 0
      %p289 = por %p287, %p288
      %p290 = scmp.ne.s32.totalorder %s282, %s284
      %p291 = scmp.eq.s32.totalorder %s33, 1
      %p292 = por %p290, %p291
      %p293 = scmp.ne.s32.totalorder %s284, %s285
      %p294 = scmp.eq.s32.totalorder %s33, 0
      %p295 = por %p293, %p294
      %p296 = scmp.ne.s32.totalorder %s284, %s285
      %p297 = scmp.eq.s32.totalorder %s34, 1
      %p298 = por %p296, %p297
      %p300 = scmp.ne.s32.totalorder %s285, %s299
      %p301 = scmp.eq.s32.totalorder %s34, 0
      %p302 = por %p300, %p301
      %s304 = sadd.s32 %s303, 1
      %p307 = scmp.eq.s32.totalorder %s28, 1
      %p308 = scmp.ne.s32.totalorder %s303, %s305
      %p309 = scmp.eq.s32.totalorder %s28, 0
      %p310 = por %p308, %p309
      %p311 = scmp.ne.s32.totalorder %s303, %s305
      %p312 = scmp.eq.s32.totalorder %s33, 1
      %p313 = por %p311, %p312
      %p314 = scmp.ne.s32.totalorder %s305, %s306
      %p315 = scmp.eq.s32.totalorder %s33, 0
      %p316 = por %p314, %p315
      %p317 = scmp.ne.s32.totalorder %s305, %s306
      %p318 = scmp.eq.s32.totalorder %s34, 1
      %p319 = por %p317, %p318
      %p321 = scmp.ne.s32.totalorder %s306, %s320
      %p322 = scmp.eq.s32.totalorder %s34, 0
      %p323 = por %p321, %p322
      %s325 = sadd.s32 %s324, 1
      %p328 = scmp.eq.s32.totalorder %s28, 1
      %p329 = scmp.ne.s32.totalorder %s324, %s326
      %p330 = scmp.eq.s32.totalorder %s28, 0
      %p331 = por %p329, %p330
      %p332 = scmp.ne.s32.totalorder %s324, %s326
      %p333 = scmp.eq.s32.totalorder %s33, 1
      %p334 = por %p332, %p333
      %p335 = scmp.ne.s32.totalorder %s326, %s327
      %p336 = scmp.eq.s32.totalorder %s33, 0
      %p337 = por %p335, %p336
      %p338 = scmp.ne.s32.totalorder %s326, %s327
      %p339 = scmp.eq.s32.totalorder %s34, 1
      %p340 = por %p338, %p339
      %p342 = scmp.ne.s32.totalorder %s327, %s341
      %p343 = scmp.eq.s32.totalorder %s34, 0
      %p344 = por %p342, %p343
      %s346 = sadd.s32 %s345, 1
      %p349 = scmp.eq.s32.totalorder %s28, 1
      %p350 = scmp.ne.s32.totalorder %s345, %s347
      %p351 = scmp.eq.s32.totalorder %s28, 0
      %p352 = por %p350, %p351
      %p353 = scmp.ne.s32.totalorder %s345, %s347
      %p354 = scmp.eq.s32.totalorder %s33, 1
      %p355 = por %p353, %p354
      %p356 = scmp.ne.s32.totalorder %s347, %s348
      %p357 = scmp.eq.s32.totalorder %s33, 0
      %p358 = por %p356, %p357
      %p359 = scmp.ne.s32.totalorder %s347, %s348
      %p360 = scmp.eq.s32.totalorder %s34, 1
      %p361 = por %p359, %p360
      %p363 = scmp.ne.s32.totalorder %s348, %s362
      %p364 = scmp.eq.s32.totalorder %s34, 0
      %p365 = por %p363, %p364
      %s367 = sadd.s32 %s366, 1
      %p370 = scmp.eq.s32.totalorder %s28, 1
      %p371 = scmp.ne.s32.totalorder %s366, %s368
      %p372 = scmp.eq.s32.totalorder %s28, 0
      %p373 = por %p371, %p372
      %p374 = scmp.ne.s32.totalorder %s366, %s368
      %p375 = scmp.eq.s32.totalorder %s33, 1
      %p376 = por %p374, %p375
      %p377 = scmp.ne.s32.totalorder %s368, %s369
      %p378 = scmp.eq.s32.totalorder %s33, 0
      %p379 = por %p377, %p378
      %p380 = scmp.ne.s32.totalorder %s368, %s369
      %p381 = scmp.eq.s32.totalorder %s34, 1
      %p382 = por %p380, %p381
      %p384 = scmp.ne.s32.totalorder %s369, %s383
      %p385 = scmp.eq.s32.totalorder %s34, 0
      %p386 = por %p384, %p385
      %s388 = sadd.s32 %s387, 1
      %p391 = scmp.eq.s32.totalorder %s28, 1
      %p392 = scmp.ne.s32.totalorder %s387, %s389
      %p393 = scmp.eq.s32.totalorder %s28, 0
      %p394 = por %p392, %p393
      %p395 = scmp.ne.s32.totalorder %s387, %s389
      %p396 = scmp.eq.s32.totalorder %s33, 1
      %p397 = por %p395, %p396
      %p398 = scmp.ne.s32.totalorder %s389, %s390
      %p399 = scmp.eq.s32.totalorder %s33, 0
      %p400 = por %p398, %p399
      %p401 = scmp.ne.s32.totalorder %s389, %s390
      %p402 = scmp.eq.s32.totalorder %s34, 1
      %p403 = por %p401, %p402
      %p405 = scmp.ne.s32.totalorder %s390, %s404
      %p406 = scmp.eq.s32.totalorder %s34, 0
      %p407 = por %p405, %p406
      %s408 = ssub.s32 %s28, %s35
      %p409 = scmp.eq.s32.totalorder %s408, 0
      %s411 = sadd.s32 %s410, 1
      %s412 = scalar_select %p409, %s410, %s411
      %p415 = pneg %p409
      %p416 = scmp.eq.s32.totalorder %s28, 1
      %p417 = por %p415, %p416
      %p418 = scmp.ne.s32.totalorder %s410, %s413
      %p419 = scmp.eq.s32.totalorder %s28, 0
      %p420 = por %p418, %p419
      %p421 = scmp.ne.s32.totalorder %s410, %s413
      %p422 = scmp.eq.s32.totalorder %s33, 1
      %p423 = por %p421, %p422
      %p424 = scmp.ne.s32.totalorder %s413, %s414
      %p425 = scmp.eq.s32.totalorder %s33, 0
      %p426 = por %p424, %p425
      %p427 = scmp.ne.s32.totalorder %s413, %s414
      %p428 = scmp.eq.s32.totalorder %s34, 1
      %p429 = por %p427, %p428
      %p431 = scmp.ne.s32.totalorder %s414, %s430
      %p432 = scmp.eq.s32.totalorder %s34, 0
      %p433 = por %p431, %p432
      %p434 = scmp.le.s32.totalorder 1, %s28
      %p435 = scmp.lt.s32.totalorder %s28, 3
      %p436 = pnand %p434, %p435
      %p437 = pneg %p436
      // Predicated region
      $region9: #{tpu_custom_call.1} parent=5 // pred_check
        _
      $region10: #{tpu_custom_call.1} parent=5 // pred_check_branch
        %439 = sbr.rel (%p436) target = $region12
      $region11: #{tpu_custom_call.1} parent=5 // pred_region
        %s440 = ssub.s32 %s28, 1
        // Predicated region
        $region13: #{tpu_custom_call.1} parent=11 // pred_check
          %p441 = pneg %p127
        $region14: #{tpu_custom_call.1} parent=11 // pred_check_branch
          %443 = sbr.rel (%p441) target = $region16
        $region15: #{tpu_custom_call.1} parent=11 // pred_region
          _
        $region16: #{tpu_custom_call.1} parent=11 // pred_fallthru
          _
        // Predicated region
        $region17: #{tpu_custom_call.1} parent=11 // pred_check
          %p444 = pneg %p148
        $region18: #{tpu_custom_call.1} parent=11 // pred_check_branch
          %446 = sbr.rel (%p444) target = $region20
        $region19: #{tpu_custom_call.1} parent=11 // pred_region
          _
        $region20: #{tpu_custom_call.1} parent=11 // pred_fallthru
          _
        // Predicated region
        $region21: #{tpu_custom_call.1} parent=11 // pred_check
          %p447 = pneg %p169
        $region22: #{tpu_custom_call.1} parent=11 // pred_check_branch
          %449 = sbr.rel (%p447) target = $region24
        $region23: #{tpu_custom_call.1} parent=11 // pred_region
          _
        $region24: #{tpu_custom_call.1} parent=11 // pred_fallthru
          _
        // Predicated region
        $region25: #{tpu_custom_call.1} parent=11 // pred_check
          %p450 = pneg %p190
        $region26: #{tpu_custom_call.1} parent=11 // pred_check_branch
          %452 = sbr.rel (%p450) target = $region28
        $region27: #{tpu_custom_call.1} parent=11 // pred_region
          %s454 = ssub.s32 512, 512
          %455 = vsyncadd [#allocation3], %s454
          %s456 = sshll.u32 [#allocation2], 4
          %s457 = int_to_ptr.vmem [resolvable:$true] %s456
          %462 = dma.hbm_to_vmem [thread:$0]  %s6, 512, %s457, [#allocation3], 64, 64, 4
        $region28: #{tpu_custom_call.1} parent=11 // pred_fallthru
          _
        // Predicated region
        $region29: #{tpu_custom_call.1} parent=11 // pred_check
          %p463 = pneg %p211
        $region30: #{tpu_custom_call.1} parent=11 // pred_check_branch
          %465 = sbr.rel (%p463) target = $region32
        $region31: #{tpu_custom_call.1} parent=11 // pred_region
          _
        $region32: #{tpu_custom_call.1} parent=11 // pred_fallthru
          _
        // Predicated region
        $region33: #{tpu_custom_call.1} parent=11 // pred_check
          %p466 = pneg %p232
        $region34: #{tpu_custom_call.1} parent=11 // pred_check_branch
          %468 = sbr.rel (%p466) target = $region36
        $region35: #{tpu_custom_call.1} parent=11 // pred_region
          _
        $region36: #{tpu_custom_call.1} parent=11 // pred_fallthru
          _
        // Predicated region
        $region37: #{tpu_custom_call.1} parent=11 // pred_check
          %p469 = pneg %p253
        $region38: #{tpu_custom_call.1} parent=11 // pred_check_branch
          %471 = sbr.rel (%p469) target = $region40
        $region39: #{tpu_custom_call.1} parent=11 // pred_region
          _
        $region40: #{tpu_custom_call.1} parent=11 // pred_fallthru
          _
        // Predicated region
        $region41: #{tpu_custom_call.1} parent=11 // pred_check
          %p472 = pneg %p274
        $region42: #{tpu_custom_call.1} parent=11 // pred_check_branch
          %474 = sbr.rel (%p472) target = $region44
        $region43: #{tpu_custom_call.1} parent=11 // pred_region
          _
        $region44: #{tpu_custom_call.1} parent=11 // pred_fallthru
          _
        // Predicated region
        $region45: #{tpu_custom_call.1} parent=11 // pred_check
          %p475 = pneg %p295
        $region46: #{tpu_custom_call.1} parent=11 // pred_check_branch
          %477 = sbr.rel (%p475) target = $region48
        $region47: #{tpu_custom_call.1} parent=11 // pred_region
          _
        $region48: #{tpu_custom_call.1} parent=11 // pred_fallthru
          _
        // Predicated region
        $region49: #{tpu_custom_call.1} parent=11 // pred_check
          %p478 = pneg %p316
        $region50: #{tpu_custom_call.1} parent=11 // pred_check_branch
          %480 = sbr.rel (%p478) target = $region52
        $region51: #{tpu_custom_call.1} parent=11 // pred_region
          _
        $region52: #{tpu_custom_call.1} parent=11 // pred_fallthru
          _
        // Predicated region
        $region53: #{tpu_custom_call.1} parent=11 // pred_check
          %p481 = pneg %p337
        $region54: #{tpu_custom_call.1} parent=11 // pred_check_branch
          %483 = sbr.rel (%p481) target = $region56
        $region55: #{tpu_custom_call.1} parent=11 // pred_region
          _
        $region56: #{tpu_custom_call.1} parent=11 // pred_fallthru
          _
        // Predicated region
        $region57: #{tpu_custom_call.1} parent=11 // pred_check
          %p484 = pneg %p358
        $region58: #{tpu_custom_call.1} parent=11 // pred_check_branch
          %486 = sbr.rel (%p484) target = $region60
        $region59: #{tpu_custom_call.1} parent=11 // pred_region
          _
        $region60: #{tpu_custom_call.1} parent=11 // pred_fallthru
          _
        // Predicated region
        $region61: #{tpu_custom_call.1} parent=11 // pred_check
          %p487 = pneg %p379
        $region62: #{tpu_custom_call.1} parent=11 // pred_check_branch
          %489 = sbr.rel (%p487) target = $region64
        $region63: #{tpu_custom_call.1} parent=11 // pred_region
          %s491 = ssub.s32 1024, 1024
          %492 = vsyncadd [#allocation6], %s491
          %s493 = sshll.u32 [#allocation5], 4
          %s494 = int_to_ptr.vmem [resolvable:$true] %s493
          %499 = dma.hbm_to_vmem [thread:$0]  %s15, 1024, %s494, [#allocation6], 64, 64, 4
        $region64: #{tpu_custom_call.1} parent=11 // pred_fallthru
          _
        // Predicated region
        $region65: #{tpu_custom_call.1} parent=11 // pred_check
          %p500 = pneg %p400
        $region66: #{tpu_custom_call.1} parent=11 // pred_check_branch
          %502 = sbr.rel (%p500) target = $region68
        $region67: #{tpu_custom_call.1} parent=11 // pred_region
          _
        $region68: #{tpu_custom_call.1} parent=11 // pred_fallthru
          _
      $region12: #{tpu_custom_call.1} parent=5 // pred_fallthru
        _
      %p503 = scmp.lt.s32.totalorder %s28, 2
      // Predicated region
      $region69: #{tpu_custom_call.1} parent=5 // pred_check
        %p504 = pneg %p503
      $region70: #{tpu_custom_call.1} parent=5 // pred_check_branch
        %506 = sbr.rel (%p504) target = $region72
      $region71: #{tpu_custom_call.1} parent=5 // pred_region
        // Predicated region
        $region73: #{tpu_custom_call.1} parent=71 // pred_check
          %p507 = pneg %p48
        $region74: #{tpu_custom_call.1} parent=71 // pred_check_branch
          %509 = sbr.rel (%p507) target = $region76
        $region75: #{tpu_custom_call.1} parent=71 // pred_region
          %s510 = smul.u32 2, %s28
          %p511 = scmp.lt.s32.totalorder %s510, 3
          %s512 = scalar_select %p511, %s510, 3
          %s513 = smul.addr %s512, 32
          %s514 = smul.addr %s513, 4
          %s515 = scalar_lea.vmem %s0, %s514
          %s516 = smul.u32 2, %s28
        $region76: #{tpu_custom_call.1} parent=71 // pred_fallthru
          _
        // Predicated region
        $region77: #{tpu_custom_call.1} parent=71 // pred_check
          %p517 = pneg %p74
        $region78: #{tpu_custom_call.1} parent=71 // pred_check_branch
          %519 = sbr.rel (%p517) target = $region80
        $region79: #{tpu_custom_call.1} parent=71 // pred_region
          %s520 = smul.u32 2, %s28
          %p521 = scmp.lt.s32.totalorder %s520, 3
          %s522 = scalar_select %p521, %s520, 3
          %s523 = smul.addr %s522, 8
          %s524 = smul.addr %s523, 4
          %s525 = scalar_lea.vmem %s1, %s524
          %s526 = smul.u32 2, %s28
        $region80: #{tpu_custom_call.1} parent=71 // pred_fallthru
          _
        // Predicated region
        $region81: #{tpu_custom_call.1} parent=71 // pred_check
          %p527 = pneg %p100
        $region82: #{tpu_custom_call.1} parent=71 // pred_check_branch
          %529 = sbr.rel (%p527) target = $region84
        $region83: #{tpu_custom_call.1} parent=71 // pred_region
          %s530 = smul.u32 2, %s28
          %p531 = scmp.lt.s32.totalorder %s530, 3
          %s532 = scalar_select %p531, %s530, 3
          %s533 = smul.addr %s532, 4
          %s534 = smul.addr %s533, 4
          %s535 = scalar_lea.vmem %s2, %s534
          %s536 = smul.u32 2, %s28
        $region84: #{tpu_custom_call.1} parent=71 // pred_fallthru
          _
      $region72: #{tpu_custom_call.1} parent=5 // pred_fallthru
        _
      %p537 = scmp.le.s32.totalorder 1, %s28
      %p538 = scmp.lt.s32.totalorder %s28, 3
      %p539 = pnand %p537, %p538
      %p540 = pneg %p539
      // Predicated region
      $region85: #{tpu_custom_call.1} parent=5 // pred_check
        _
      $region86: #{tpu_custom_call.1} parent=5 // pred_check_branch
        %542 = sbr.rel (%p539) target = $region88
      $region87: #{tpu_custom_call.1} parent=5 // pred_region
        %s543 = ssub.s32 %s28, 1
        // Predicated region
        $region89: #{tpu_custom_call.1} parent=87 // pred_check
          %p544 = pneg %p190
        $region90: #{tpu_custom_call.1} parent=87 // pred_check_branch
          %546 = sbr.rel (%p544) target = $region92
        $region91: #{tpu_custom_call.1} parent=87 // pred_region
          %547 = dma.done [#allocation3], 512
        $region92: #{tpu_custom_call.1} parent=87 // pred_fallthru
          _
        // Predicated region
        $region93: #{tpu_custom_call.1} parent=87 // pred_check
          %p548 = pneg %p379
        $region94: #{tpu_custom_call.1} parent=87 // pred_check_branch
          %550 = sbr.rel (%p548) target = $region96
        $region95: #{tpu_custom_call.1} parent=87 // pred_region
          %551 = dma.done [#allocation6], 1024
        $region96: #{tpu_custom_call.1} parent=87 // pred_fallthru
          _
        %s552 = smul.u32 2, %s33
        %p553 = scmp.lt.s32.totalorder %s552, 3
        %s554 = scalar_select %p553, %s552, 3
        %s555 = smul.addr %s554, 32
        %s556 = smul.addr %s555, 4
        %s557 = scalar_lea.vmem %s0, %s556
        %p558 = pneg %p54
        %p559 = pneg %p51
        %s560 = smul.u32 2, %s33
        %p561 = scmp.lt.s32.totalorder %s560, 3
        %s562 = scalar_select %p561, %s560, 3
        %s563 = smul.addr %s562, 8
        %s564 = smul.addr %s563, 4
        %s565 = scalar_lea.vmem %s1, %s564
        %p566 = pneg %p80
        %p567 = pneg %p77
        %s568 = smul.u32 2, %s33
        %p569 = scmp.lt.s32.totalorder %s568, 3
        %s570 = scalar_select %p569, %s568, 3
        %s571 = smul.addr %s570, 4
        %s572 = smul.addr %s571, 4
        %s573 = scalar_lea.vmem %s2, %s572
        %p574 = pneg %p106
        %p575 = pneg %p103
        %p576 = pneg %p127
        %p577 = pneg %p124
        %p578 = pneg %p148
        %p579 = pneg %p145
        %p580 = pneg %p169
        %p581 = pneg %p166
        %p582 = pneg %p190
        %p583 = pneg %p187
        %p584 = pneg %p211
        %p585 = pneg %p208
        %p586 = pneg %p232
        %p587 = pneg %p229
        %p588 = pneg %p253
        %p589 = pneg %p250
        %p590 = pneg %p274
        %p591 = pneg %p271
        %p592 = pneg %p295
        %p593 = pneg %p292
        %p594 = pneg %p316
        %p595 = pneg %p313
        %p596 = pneg %p337
        %p597 = pneg %p334
        %p598 = pneg %p358
        %p599 = pneg %p355
        %p600 = pneg %p379
        %p601 = pneg %p376
        %p602 = pneg %p400
        %p603 = pneg %p397
        %p604 = pneg %p426
        %p605 = pneg %p423
        %s606 = sand.u32 %s413, 1
        %s607 = scalar_lea.sflag [#allocation4], %s606
        %s608 = sand.u32 %s413, 1
        %s609 = smul.addr %s608, 2
        %s610 = scalar_lea.vmem [#allocation7], %s609
        %s611 = smul.u32 2, %s33
        %p612 = scmp.lt.s32.totalorder %s611, 3
        %s613 = scalar_select %p612, %s611, 3
        %s614 = smul.addr %s613, 32
        %s615 = smul.addr %s614, 4
        %s616 = scalar_lea.vmem %s0, %s615
        %s617 = smul.u32 2, %s33
        %s618 = smul.u32 2, %s33
        %p619 = scmp.lt.s32.totalorder %s618, 3
        %s620 = scalar_select %p619, %s618, 3
        %s621 = smul.addr %s620, 8
        %s622 = smul.addr %s621, 4
        %s623 = scalar_lea.vmem %s1, %s622
        %s624 = smul.u32 2, %s33
        %s625 = smul.u32 2, %s33
        %p626 = scmp.lt.s32.totalorder %s625, 3
        %s627 = scalar_select %p626, %s625, 3
        %s628 = smul.addr %s627, 4
        %s629 = smul.addr %s628, 4
        %s630 = scalar_lea.vmem %s2, %s629
        %s631 = smul.u32 2, %s33
        %v633 = vld [vmem:[%s3] sm:$0x3]
        %v634 = vld [vmem:[%s616] sm:$0xf]
        %v635 = vld [vmem:[%s616 + $0x4] sm:$0xf]
        %v636 = vld [vmem:[%s616 + $0x8] sm:$0xf]
        %v637 = vld [vmem:[%s616 + $0xc] sm:$0xf]
        %v638 = vld [vmem:[%s616 + $0x10] sm:$0xf]
        %v639 = vld [vmem:[%s616 + $0x14] sm:$0xf]
        %v640 = vld [vmem:[%s616 + $0x18] sm:$0xf]
        %v641 = vld [vmem:[%s616 + $0x1c] sm:$0xf]
        %v642 = vld [vmem:[%s616 + $0x20] sm:$0xf]
        %v643 = vld [vmem:[%s616 + $0x24] sm:$0xf]
        %v644 = vld [vmem:[%s616 + $0x28] sm:$0xf]
        %v645 = vld [vmem:[%s616 + $0x2c] sm:$0xf]
        %v646 = vld [vmem:[%s616 + $0x30] sm:$0xf]
        %v647 = vld [vmem:[%s616 + $0x34] sm:$0xf]
        %v648 = vld [vmem:[%s616 + $0x38] sm:$0xf]
        %v649 = vld [vmem:[%s616 + $0x3c] sm:$0xf]
        %v650 = vld [vmem:[%s616 + $0x40] sm:$0xf]
        %v651 = vld [vmem:[%s616 + $0x44] sm:$0xf]
        %v652 = vld [vmem:[%s616 + $0x48] sm:$0xf]
        %v653 = vld [vmem:[%s616 + $0x4c] sm:$0xf]
        %v654 = vld [vmem:[%s616 + $0x50] sm:$0xf]
        %v655 = vld [vmem:[%s616 + $0x54] sm:$0xf]
        %v656 = vld [vmem:[%s616 + $0x58] sm:$0xf]
        %v657 = vld [vmem:[%s616 + $0x5c] sm:$0xf]
        %v658 = vld [vmem:[%s616 + $0x60] sm:$0xf]
        %v659 = vld [vmem:[%s616 + $0x64] sm:$0xf]
        %v660 = vld [vmem:[%s616 + $0x68] sm:$0xf]
        %v661 = vld [vmem:[%s616 + $0x6c] sm:$0xf]
        %v662 = vld [vmem:[%s616 + $0x70] sm:$0xf]
        %v663 = vld [vmem:[%s616 + $0x74] sm:$0xf]
        %v664 = vld [vmem:[%s616 + $0x78] sm:$0xf]
        %v665 = vld [vmem:[%s616 + $0x7c] sm:$0xf]
        %v668 = vunpack.c.l.s4 1966171168
        %v669 = vunpack.c.0.s8 %v668
        %v670 = vlaneseq
        %v671 = vshrl.u32 %v670, 7
        %v672 = vsub.s32 %v669, %v671
        %v673 = vrot.slane %v633, %v672
        %v674 = vcombine.high %v673, %v673
        %v676 = vunpack.c.l.s4 1966171168
        %v677 = vunpack.c.0.s8 %v676
        %v678 = vlaneseq
        %v679 = vshrl.u32 %v678, 7
        %v680 = vsub.s32 %v677, %v679
        %v681 = vrot.slane %v673, %v680
        %v683 = vunpack.c.l.s4 1966171168
        %v684 = vunpack.c.0.s8 %v683
        %v685 = vlaneseq
        %v686 = vshrl.u32 %v685, 7
        %v687 = vsub.s32 %v684, %v686
        %v688 = vrot.slane %v674, %v687
        %v723 = vunpack.c.l.b16 %v634
        %v724 = vunpack.c.l.b16 %v635
        %v725 = vunpack.c.l.b16 %v636
        %v726 = vunpack.c.l.b16 %v637
        %v727 = vunpack.c.l.b16 %v638
        %v728 = vunpack.c.l.b16 %v639
        %v729 = vunpack.c.l.b16 %v640
        %v730 = vunpack.c.l.b16 %v641
        %v731 = vunpack.c.l.b16 %v642
        %v732 = vunpack.c.l.b16 %v643
        %v733 = vunpack.c.l.b16 %v644
        %v734 = vunpack.c.l.b16 %v645
        %v735 = vunpack.c.l.b16 %v646
        %v736 = vunpack.c.l.b16 %v647
        %v737 = vunpack.c.l.b16 %v648
        %v738 = vunpack.c.l.b16 %v649
        %v739 = vunpack.c.l.b16 %v650
        %v740 = vunpack.c.l.b16 %v651
        %v741 = vunpack.c.l.b16 %v652
        %v742 = vunpack.c.l.b16 %v653
        %v743 = vunpack.c.l.b16 %v654
        %v744 = vunpack.c.l.b16 %v655
        %v745 = vunpack.c.l.b16 %v656
        %v746 = vunpack.c.l.b16 %v657
        %v747 = vunpack.c.l.b16 %v658
        %v748 = vunpack.c.l.b16 %v659
        %v749 = vunpack.c.l.b16 %v660
        %v750 = vunpack.c.l.b16 %v661
        %v751 = vunpack.c.l.b16 %v662
        %v752 = vunpack.c.l.b16 %v663
        %v753 = vunpack.c.l.b16 %v664
        %v754 = vunpack.c.l.b16 %v665
        %v755 = vpack.c.b16 %v724, %v723
        %v756 = vpack.c.b16 %v726, %v725
        %v757 = vpack.c.b16 %v728, %v727
        %v758 = vpack.c.b16 %v730, %v729
        %v759 = vpack.c.b16 %v732, %v731
        %v760 = vpack.c.b16 %v734, %v733
        %v761 = vpack.c.b16 %v736, %v735
        %v762 = vpack.c.b16 %v738, %v737
        %v763 = vpack.c.b16 %v740, %v739
        %v764 = vpack.c.b16 %v742, %v741
        %v765 = vpack.c.b16 %v744, %v743
        %v766 = vpack.c.b16 %v746, %v745
        %v767 = vpack.c.b16 %v748, %v747
        %v768 = vpack.c.b16 %v750, %v749
        %v769 = vpack.c.b16 %v752, %v751
        %v770 = vpack.c.b16 %v754, %v753
        %787 = vmatprep.subr.bf16.mxu0 0
        %788 = vmatpush1.bf16.msra.mxu0 %v755
        %789 = vmatprep.subr.bf16.mxu0 0
        %790 = vmatpush1.bf16.msra.mxu0 %v756
        %791 = vmatprep.subr.bf16.mxu0 0
        %792 = vmatpush1.bf16.msra.mxu0 %v757
        %793 = vmatprep.subr.bf16.mxu0 0
        %794 = vmatpush1.bf16.msra.mxu0 %v758
        %795 = vmatprep.subr.bf16.mxu0 0
        %796 = vmatpush1.bf16.msra.mxu0 %v759
        %797 = vmatprep.subr.bf16.mxu0 0
        %798 = vmatpush1.bf16.msra.mxu0 %v760
        %799 = vmatprep.subr.bf16.mxu0 0
        %800 = vmatpush1.bf16.msra.mxu0 %v761
        %801 = vmatprep.subr.bf16.mxu0 0
        %802 = vmatpush1.bf16.msra.mxu0 %v762
        %803 = vmatprep.subr.bf16.mxu0 0
        %804 = vmatpush1.bf16.msra.mxu0 %v763
        %805 = vmatprep.subr.bf16.mxu0 0
        %806 = vmatpush1.bf16.msra.mxu0 %v764
        %807 = vmatprep.subr.bf16.mxu0 0
        %808 = vmatpush1.bf16.msra.mxu0 %v765
        %809 = vmatprep.subr.bf16.mxu0 0
        %810 = vmatpush1.bf16.msra.mxu0 %v766
        %811 = vmatprep.subr.bf16.mxu0 0
        %812 = vmatpush1.bf16.msra.mxu0 %v767
        %813 = vmatprep.subr.bf16.mxu0 0
        %814 = vmatpush1.bf16.msra.mxu0 %v768
        %815 = vmatprep.subr.bf16.mxu0 0
        %816 = vmatpush1.bf16.msra.mxu0 %v769
        %817 = vmatprep.subr.bf16.mxu0 0
        %818 = vmatpush1.bf16.msra.mxu0 %v770
        %819 = vmatprep.mubr.bf16.mxu0 %v688
        %820 = vmatmul.mubr.bf16.gmra.mrb[0].mxu0 %v681
        %v821 = vpop.f32.mrb[0].mxu0
        %v822 = vadd.f32 0.0, %v821
        %v823 = vpop.f32.mrb[0].mxu0
        %v824 = vpop.f32.mrb[0].mxu0
        %v825 = vpop.f32.mrb[0].mxu0
        %826 = vdwg.mxu0
        %v827 = vld [vmem:[%s4] sm:$0x1]
        %v828 = vld [vmem:[%s623] sm:$0xf]
        %v829 = vld [vmem:[%s623 + $0x4] sm:$0xf]
        %v830 = vld [vmem:[%s623 + $0x8] sm:$0xf]
        %v831 = vld [vmem:[%s623 + $0xc] sm:$0xf]
        %v832 = vld [vmem:[%s623 + $0x10] sm:$0xf]
        %v833 = vld [vmem:[%s623 + $0x14] sm:$0xf]
        %v834 = vld [vmem:[%s623 + $0x18] sm:$0xf]
        %v835 = vld [vmem:[%s623 + $0x1c] sm:$0xf]
        %v844 = vunpack.c.l.b16 %v828
        %v845 = vunpack.c.l.b16 %v829
        %v846 = vunpack.c.l.b16 %v830
        %v847 = vunpack.c.l.b16 %v831
        %v848 = vunpack.c.l.b16 %v832
        %v849 = vunpack.c.l.b16 %v833
        %v850 = vunpack.c.l.b16 %v834
        %v851 = vunpack.c.l.b16 %v835
        %v852 = vpack.c.b16 %v845, %v844
        %v853 = vpack.c.b16 %v847, %v846
        %v854 = vpack.c.b16 %v849, %v848
        %v855 = vpack.c.b16 %v851, %v850
        %vm860 = vcmask 523264
        %v862 = vsel %vm860, %v827, 0
        %864 = vmatprep.subr.bf16.mxu0 0
        %865 = vmatpush1.bf16.msra.mxu0 %v852
        %866 = vmatprep.subr.bf16.mxu0 0
        %867 = vmatpush1.bf16.msra.mxu0 %v853
        %868 = vmatprep.subr.bf16.mxu0 0
        %869 = vmatpush1.bf16.msra.mxu0 %v854
        %870 = vmatprep.subr.bf16.mxu0 0
        %871 = vmatpush1.bf16.msra.mxu0 %v855
        %872 = vmatprep.subr.bf16.mxu0 0
        %873 = vmatpush1.bf16.msra.mxu0 0
        %874 = vmatprep.subr.bf16.mxu0 0
        %875 = vmatpush1.bf16.msra.mxu0 0
        %876 = vmatprep.subr.bf16.mxu0 0
        %877 = vmatpush1.bf16.msra.mxu0 0
        %878 = vmatprep.subr.bf16.mxu0 0
        %879 = vmatpush1.bf16.msra.mxu0 0
        %880 = vmatprep.subr.bf16.mxu0 0
        %881 = vmatpush1.bf16.msra.mxu0 0
        %882 = vmatprep.subr.bf16.mxu0 0
        %883 = vmatpush1.bf16.msra.mxu0 0
        %884 = vmatprep.subr.bf16.mxu0 0
        %885 = vmatpush1.bf16.msra.mxu0 0
        %886 = vmatprep.subr.bf16.mxu0 0
        %887 = vmatpush1.bf16.msra.mxu0 0
        %888 = vmatprep.subr.bf16.mxu0 0
        %889 = vmatpush1.bf16.msra.mxu0 0
        %890 = vmatprep.subr.bf16.mxu0 0
        %891 = vmatpush1.bf16.msra.mxu0 0
        %892 = vmatprep.subr.bf16.mxu0 0
        %893 = vmatpush1.bf16.msra.mxu0 0
        %894 = vmatprep.subr.bf16.mxu0 0
        %895 = vmatpush1.bf16.msra.mxu0 0
        %896 = vmatprep.mubr.bf16.mxu0 0
        %897 = vmatmul.mubr.bf16.gmra.mrb[0].mxu0 %v862
        %v898 = vpop.f32.mrb[0].mxu0
        %v899 = vadd.f32 0.0, %v898
        %v900 = vpop.f32.mrb[0].mxu0
        %v901 = vpop.f32.mrb[0].mxu0
        %v902 = vpop.f32.mrb[0].mxu0
        %903 = vdwg.mxu0
        %v905 = vrot.slane %v899, 1
        %v907 = vadd.f32 %v899, %v905
        %v908 = vld [vmem:[%s5] sm:$0x1]
        %v909 = vld [vmem:[%s630] sm:$0xff]
        %v910 = vld [vmem:[%s630 + $0x8] sm:$0xff]
        %v913 = vunpack.c.l.b16 %v909
        %v914 = vunpack.c.h.b16 %v909
        %v915 = vunpack.c.l.b16 %v910
        %v916 = vunpack.c.h.b16 %v910
        %v917 = vpack.c.b16 %v915, %v913
        %v918 = vpack.c.b16 %v916, %v914
        %vm921 = vcmask 130048
        %v923 = vsel %vm921, %v908, 0
        %925 = vmatprep.subr.bf16.mxu0 %v918
        %926 = vmatpush1.bf16.msra.mxu0 %v917
        %927 = vmatprep.subr.bf16.mxu0 0
        %928 = vmatpush1.bf16.msra.mxu0 0
        %929 = vmatprep.subr.bf16.mxu0 0
        %930 = vmatpush1.bf16.msra.mxu0 0
        %931 = vmatprep.subr.bf16.mxu0 0
        %932 = vmatpush1.bf16.msra.mxu0 0
        %933 = vmatprep.subr.bf16.mxu0 0
        %934 = vmatpush1.bf16.msra.mxu0 0
        %935 = vmatprep.subr.bf16.mxu0 0
        %936 = vmatpush1.bf16.msra.mxu0 0
        %937 = vmatprep.subr.bf16.mxu0 0
        %938 = vmatpush1.bf16.msra.mxu0 0
        %939 = vmatprep.subr.bf16.mxu0 0
        %940 = vmatpush1.bf16.msra.mxu0 0
        %941 = vmatprep.subr.bf16.mxu0 0
        %942 = vmatpush1.bf16.msra.mxu0 0
        %943 = vmatprep.subr.bf16.mxu0 0
        %944 = vmatpush1.bf16.msra.mxu0 0
        %945 = vmatprep.subr.bf16.mxu0 0
        %946 = vmatpush1.bf16.msra.mxu0 0
        %947 = vmatprep.subr.bf16.mxu0 0
        %948 = vmatpush1.bf16.msra.mxu0 0
        %949 = vmatprep.subr.bf16.mxu0 0
        %950 = vmatpush1.bf16.msra.mxu0 0
        %951 = vmatprep.subr.bf16.mxu0 0
        %952 = vmatpush1.bf16.msra.mxu0 0
        %953 = vmatprep.subr.bf16.mxu0 0
        %954 = vmatpush1.bf16.msra.mxu0 0
        %955 = vmatprep.subr.bf16.mxu0 0
        %956 = vmatpush1.bf16.msra.mxu0 0
        %957 = vmatprep.mubr.bf16.mxu0 0
        %958 = vmatmul.mubr.bf16.gmra.mrb[0].mxu0 %v923
        %v959 = vpop.f32.mrb[0].mxu0
        %v960 = vadd.f32 0.0, %v959
        %v961 = vpop.f32.mrb[0].mxu0
        %v962 = vadd.f32 0.0, %v961
        %v963 = vpop.f32.mrb[0].mxu0
        %v964 = vpop.f32.mrb[0].mxu0
        %965 = vdwg.mxu0
        %v968 = vrot.slane %v960, 1
        %v969 = vrot.slane %v962, 1
        %v972 = vadd.f32 %v960, %v968
        %v973 = vadd.f32 %v962, %v969
        %s974 = scalar_lea.vmem %s616, 128
        %v975 = vld [vmem:[%s974] sm:$0xf]
        %v976 = vld [vmem:[%s974 + $0x4] sm:$0xf]
        %v977 = vld [vmem:[%s974 + $0x8] sm:$0xf]
        %v978 = vld [vmem:[%s974 + $0xc] sm:$0xf]
        %v979 = vld [vmem:[%s974 + $0x10] sm:$0xf]
        %v980 = vld [vmem:[%s974 + $0x14] sm:$0xf]
        %v981 = vld [vmem:[%s974 + $0x18] sm:$0xf]
        %v982 = vld [vmem:[%s974 + $0x1c] sm:$0xf]
        %v983 = vld [vmem:[%s974 + $0x20] sm:$0xf]
        %v984 = vld [vmem:[%s974 + $0x24] sm:$0xf]
        %v985 = vld [vmem:[%s974 + $0x28] sm:$0xf]
        %v986 = vld [vmem:[%s974 + $0x2c] sm:$0xf]
        %v987 = vld [vmem:[%s974 + $0x30] sm:$0xf]
        %v988 = vld [vmem:[%s974 + $0x34] sm:$0xf]
        %v989 = vld [vmem:[%s974 + $0x38] sm:$0xf]
        %v990 = vld [vmem:[%s974 + $0x3c] sm:$0xf]
        %v991 = vld [vmem:[%s974 + $0x40] sm:$0xf]
        %v992 = vld [vmem:[%s974 + $0x44] sm:$0xf]
        %v993 = vld [vmem:[%s974 + $0x48] sm:$0xf]
        %v994 = vld [vmem:[%s974 + $0x4c] sm:$0xf]
        %v995 = vld [vmem:[%s974 + $0x50] sm:$0xf]
        %v996 = vld [vmem:[%s974 + $0x54] sm:$0xf]
        %v997 = vld [vmem:[%s974 + $0x58] sm:$0xf]
        %v998 = vld [vmem:[%s974 + $0x5c] sm:$0xf]
        %v999 = vld [vmem:[%s974 + $0x60] sm:$0xf]
        %v1000 = vld [vmem:[%s974 + $0x64] sm:$0xf]
        %v1001 = vld [vmem:[%s974 + $0x68] sm:$0xf]
        %v1002 = vld [vmem:[%s974 + $0x6c] sm:$0xf]
        %v1003 = vld [vmem:[%s974 + $0x70] sm:$0xf]
        %v1004 = vld [vmem:[%s974 + $0x74] sm:$0xf]
        %v1005 = vld [vmem:[%s974 + $0x78] sm:$0xf]
        %v1006 = vld [vmem:[%s974 + $0x7c] sm:$0xf]
        %v1039 = vunpack.c.l.b16 %v975
        %v1040 = vunpack.c.l.b16 %v976
        %v1041 = vunpack.c.l.b16 %v977
        %v1042 = vunpack.c.l.b16 %v978
        %v1043 = vunpack.c.l.b16 %v979
        %v1044 = vunpack.c.l.b16 %v980
        %v1045 = vunpack.c.l.b16 %v981
        %v1046 = vunpack.c.l.b16 %v982
        %v1047 = vunpack.c.l.b16 %v983
        %v1048 = vunpack.c.l.b16 %v984
        %v1049 = vunpack.c.l.b16 %v985
        %v1050 = vunpack.c.l.b16 %v986
        %v1051 = vunpack.c.l.b16 %v987
        %v1052 = vunpack.c.l.b16 %v988
        %v1053 = vunpack.c.l.b16 %v989
        %v1054 = vunpack.c.l.b16 %v990
        %v1055 = vunpack.c.l.b16 %v991
        %v1056 = vunpack.c.l.b16 %v992
        %v1057 = vunpack.c.l.b16 %v993
        %v1058 = vunpack.c.l.b16 %v994
        %v1059 = vunpack.c.l.b16 %v995
        %v1060 = vunpack.c.l.b16 %v996
        %v1061 = vunpack.c.l.b16 %v997
        %v1062 = vunpack.c.l.b16 %v998
        %v1063 = vunpack.c.l.b16 %v999
        %v1064 = vunpack.c.l.b16 %v1000
        %v1065 = vunpack.c.l.b16 %v1001
        %v1066 = vunpack.c.l.b16 %v1002
        %v1067 = vunpack.c.l.b16 %v1003
        %v1068 = vunpack.c.l.b16 %v1004
        %v1069 = vunpack.c.l.b16 %v1005
        %v1070 = vunpack.c.l.b16 %v1006
        %v1071 = vpack.c.b16 %v1040, %v1039
        %v1072 = vpack.c.b16 %v1042, %v1041
        %v1073 = vpack.c.b16 %v1044, %v1043
        %v1074 = vpack.c.b16 %v1046, %v1045
        %v1075 = vpack.c.b16 %v1048, %v1047
        %v1076 = vpack.c.b16 %v1050, %v1049
        %v1077 = vpack.c.b16 %v1052, %v1051
        %v1078 = vpack.c.b16 %v1054, %v1053
        %v1079 = vpack.c.b16 %v1056, %v1055
        %v1080 = vpack.c.b16 %v1058, %v1057
        %v1081 = vpack.c.b16 %v1060, %v1059
        %v1082 = vpack.c.b16 %v1062, %v1061
        %v1083 = vpack.c.b16 %v1064, %v1063
        %v1084 = vpack.c.b16 %v1066, %v1065
        %v1085 = vpack.c.b16 %v1068, %v1067
        %v1086 = vpack.c.b16 %v1070, %v1069
        %1103 = vmatprep.subr.bf16.mxu0 0
        %1104 = vmatpush1.bf16.msra.mxu0 %v1071
        %1105 = vmatprep.subr.bf16.mxu0 0
        %1106 = vmatpush1.bf16.msra.mxu0 %v1072
        %1107 = vmatprep.subr.bf16.mxu0 0
        %1108 = vmatpush1.bf16.msra.mxu0 %v1073
        %1109 = vmatprep.subr.bf16.mxu0 0
        %1110 = vmatpush1.bf16.msra.mxu0 %v1074
        %1111 = vmatprep.subr.bf16.mxu0 0
        %1112 = vmatpush1.bf16.msra.mxu0 %v1075
        %1113 = vmatprep.subr.bf16.mxu0 0
        %1114 = vmatpush1.bf16.msra.mxu0 %v1076
        %1115 = vmatprep.subr.bf16.mxu0 0
        %1116 = vmatpush1.bf16.msra.mxu0 %v1077
        %1117 = vmatprep.subr.bf16.mxu0 0
        %1118 = vmatpush1.bf16.msra.mxu0 %v1078
        %1119 = vmatprep.subr.bf16.mxu0 0
        %1120 = vmatpush1.bf16.msra.mxu0 %v1079
        %1121 = vmatprep.subr.bf16.mxu0 0
        %1122 = vmatpush1.bf16.msra.mxu0 %v1080
        %1123 = vmatprep.subr.bf16.mxu0 0
        %1124 = vmatpush1.bf16.msra.mxu0 %v1081
        %1125 = vmatprep.subr.bf16.mxu0 0
        %1126 = vmatpush1.bf16.msra.mxu0 %v1082
        %1127 = vmatprep.subr.bf16.mxu0 0
        %1128 = vmatpush1.bf16.msra.mxu0 %v1083
        %1129 = vmatprep.subr.bf16.mxu0 0
        %1130 = vmatpush1.bf16.msra.mxu0 %v1084
        %1131 = vmatprep.subr.bf16.mxu0 0
        %1132 = vmatpush1.bf16.msra.mxu0 %v1085
        %1133 = vmatprep.subr.bf16.mxu0 0
        %1134 = vmatpush1.bf16.msra.mxu0 %v1086
        %1135 = vmatprep.mubr.bf16.mxu0 %v688
        %1136 = vmatmul.mubr.bf16.gmra.mrb[0].mxu0 %v681
        %v1137 = vpop.f32.mrb[0].mxu0
        %v1138 = vadd.f32 0.0, %v1137
        %v1139 = vpop.f32.mrb[0].mxu0
        %v1140 = vpop.f32.mrb[0].mxu0
        %v1141 = vpop.f32.mrb[0].mxu0
        %1142 = vdwg.mxu0
        %s1143 = scalar_lea.vmem %s623, 32
        %v1144 = vld [vmem:[%s1143] sm:$0xf]
        %v1145 = vld [vmem:[%s1143 + $0x4] sm:$0xf]
        %v1146 = vld [vmem:[%s1143 + $0x8] sm:$0xf]
        %v1147 = vld [vmem:[%s1143 + $0xc] sm:$0xf]
        %v1148 = vld [vmem:[%s1143 + $0x10] sm:$0xf]
        %v1149 = vld [vmem:[%s1143 + $0x14] sm:$0xf]
        %v1150 = vld [vmem:[%s1143 + $0x18] sm:$0xf]
        %v1151 = vld [vmem:[%s1143 + $0x1c] sm:$0xf]
        %v1160 = vunpack.c.l.b16 %v1144
        %v1161 = vunpack.c.l.b16 %v1145
        %v1162 = vunpack.c.l.b16 %v1146
        %v1163 = vunpack.c.l.b16 %v1147
        %v1164 = vunpack.c.l.b16 %v1148
        %v1165 = vunpack.c.l.b16 %v1149
        %v1166 = vunpack.c.l.b16 %v1150
        %v1167 = vunpack.c.l.b16 %v1151
        %v1168 = vpack.c.b16 %v1161, %v1160
        %v1169 = vpack.c.b16 %v1163, %v1162
        %v1170 = vpack.c.b16 %v1165, %v1164
        %v1171 = vpack.c.b16 %v1167, %v1166
        %1176 = vmatprep.subr.bf16.mxu0 0
        %1177 = vmatpush1.bf16.msra.mxu0 %v1168
        %1178 = vmatprep.subr.bf16.mxu0 0
        %1179 = vmatpush1.bf16.msra.mxu0 %v1169
        %1180 = vmatprep.subr.bf16.mxu0 0
        %1181 = vmatpush1.bf16.msra.mxu0 %v1170
        %1182 = vmatprep.subr.bf16.mxu0 0
        %1183 = vmatpush1.bf16.msra.mxu0 %v1171
        %1184 = vmatprep.subr.bf16.mxu0 0
        %1185 = vmatpush1.bf16.msra.mxu0 0
        %1186 = vmatprep.subr.bf16.mxu0 0
        %1187 = vmatpush1.bf16.msra.mxu0 0
        %1188 = vmatprep.subr.bf16.mxu0 0
        %1189 = vmatpush1.bf16.msra.mxu0 0
        %1190 = vmatprep.subr.bf16.mxu0 0
        %1191 = vmatpush1.bf16.msra.mxu0 0
        %1192 = vmatprep.subr.bf16.mxu0 0
        %1193 = vmatpush1.bf16.msra.mxu0 0
        %1194 = vmatprep.subr.bf16.mxu0 0
        %1195 = vmatpush1.bf16.msra.mxu0 0
        %1196 = vmatprep.subr.bf16.mxu0 0
        %1197 = vmatpush1.bf16.msra.mxu0 0
        %1198 = vmatprep.subr.bf16.mxu0 0
        %1199 = vmatpush1.bf16.msra.mxu0 0
        %1200 = vmatprep.subr.bf16.mxu0 0
        %1201 = vmatpush1.bf16.msra.mxu0 0
        %1202 = vmatprep.subr.bf16.mxu0 0
        %1203 = vmatpush1.bf16.msra.mxu0 0
        %1204 = vmatprep.subr.bf16.mxu0 0
        %1205 = vmatpush1.bf16.msra.mxu0 0
        %1206 = vmatprep.subr.bf16.mxu0 0
        %1207 = vmatpush1.bf16.msra.mxu0 0
        %1208 = vmatprep.mubr.bf16.mxu0 0
        %1209 = vmatmul.mubr.bf16.gmra.mrb[0].mxu0 %v862
        %v1210 = vpop.f32.mrb[0].mxu0
        %v1211 = vadd.f32 0.0, %v1210
        %v1212 = vpop.f32.mrb[0].mxu0
        %v1213 = vpop.f32.mrb[0].mxu0
        %v1214 = vpop.f32.mrb[0].mxu0
        %1215 = vdwg.mxu0
        %v1217 = vrot.slane %v1211, 1
        %v1219 = vadd.f32 %v1211, %v1217
        %s1220 = scalar_lea.vmem %s630, 16
        %v1221 = vld [vmem:[%s1220] sm:$0xff]
        %v1222 = vld [vmem:[%s1220 + $0x8] sm:$0xff]
        %v1225 = vunpack.c.l.b16 %v1221
        %v1226 = vunpack.c.h.b16 %v1221
        %v1227 = vunpack.c.l.b16 %v1222
        %v1228 = vunpack.c.h.b16 %v1222
        %v1229 = vpack.c.b16 %v1227, %v1225
        %v1230 = vpack.c.b16 %v1228, %v1226
        %1233 = vmatprep.subr.bf16.mxu0 %v1230
        %1234 = vmatpush1.bf16.msra.mxu0 %v1229
        %1235 = vmatprep.subr.bf16.mxu0 0
        %1236 = vmatpush1.bf16.msra.mxu0 0
        %1237 = vmatprep.subr.bf16.mxu0 0
        %1238 = vmatpush1.bf16.msra.mxu0 0
        %1239 = vmatprep.subr.bf16.mxu0 0
        %1240 = vmatpush1.bf16.msra.mxu0 0
        %1241 = vmatprep.subr.bf16.mxu0 0
        %1242 = vmatpush1.bf16.msra.mxu0 0
        %1243 = vmatprep.subr.bf16.mxu0 0
        %1244 = vmatpush1.bf16.msra.mxu0 0
        %1245 = vmatprep.subr.bf16.mxu0 0
        %1246 = vmatpush1.bf16.msra.mxu0 0
        %1247 = vmatprep.subr.bf16.mxu0 0
        %1248 = vmatpush1.bf16.msra.mxu0 0
        %1249 = vmatprep.subr.bf16.mxu0 0
        %1250 = vmatpush1.bf16.msra.mxu0 0
        %1251 = vmatprep.subr.bf16.mxu0 0
        %1252 = vmatpush1.bf16.msra.mxu0 0
        %1253 = vmatprep.subr.bf16.mxu0 0
        %1254 = vmatpush1.bf16.msra.mxu0 0
        %1255 = vmatprep.subr.bf16.mxu0 0
        %1256 = vmatpush1.bf16.msra.mxu0 0
        %1257 = vmatprep.subr.bf16.mxu0 0
        %1258 = vmatpush1.bf16.msra.mxu0 0
        %1259 = vmatprep.subr.bf16.mxu0 0
        %1260 = vmatpush1.bf16.msra.mxu0 0
        %1261 = vmatprep.subr.bf16.mxu0 0
        %1262 = vmatpush1.bf16.msra.mxu0 0
        %1263 = vmatprep.subr.bf16.mxu0 0
        %1264 = vmatpush1.bf16.msra.mxu0 0
        %1265 = vmatprep.mubr.bf16.mxu0 0
        %1266 = vmatmul.mubr.bf16.gmra.mrb[0].mxu0 %v923
        %v1267 = vpop.f32.mrb[0].mxu0
        %v1268 = vadd.f32 0.0, %v1267
        %v1269 = vpop.f32.mrb[0].mxu0
        %v1270 = vadd.f32 0.0, %v1269
        %v1271 = vpop.f32.mrb[0].mxu0
        %v1272 = vpop.f32.mrb[0].mxu0
        %1273 = vdwg.mxu0
        %v1276 = vrot.slane %v1268, 1
        %v1277 = vrot.slane %v1270, 1
        %v1280 = vadd.f32 %v1268, %v1276
        %v1281 = vadd.f32 %v1270, %v1277
        %v1283 = vrot.slane %v1138, 7
        %vm1285 = vcmask 1040384
        %v1286 = vsel %vm1285, %v822, %v1283
        %v1287 = vmul.f32 %v1286, 0.00390625
        %v1289 = vrot.slane %v1219, 7
        %v1291 = vsel %vm1285, %v907, %v1289
        %v1294 = vrot.slane %v1280, 7
        %v1295 = vrot.slane %v1281, 7
        %v1298 = vsel %vm1285, %v972, %v1294
        %v1299 = vsel %vm1285, %v973, %v1295
        %v1300 = vpack.c.bf16 %v1287, %v1287
        %v1301 = vld [vmem:[#allocation2] sm:$0xf]
        %v1302 = vld [vmem:[#allocation2 + $0x4] sm:$0xf]
        %v1303 = vld [vmem:[#allocation2 + $0x8] sm:$0xf]
        %v1304 = vld [vmem:[#allocation2 + $0xc] sm:$0xf]
        %v1305 = vld [vmem:[#allocation2 + $0x10] sm:$0xf]
        %v1306 = vld [vmem:[#allocation2 + $0x14] sm:$0xf]
        %v1307 = vld [vmem:[#allocation2 + $0x18] sm:$0xf]
        %v1308 = vld [vmem:[#allocation2 + $0x1c] sm:$0xf]
        %v1317 = vunpack.c.l.b16 %v1301
        %v1318 = vunpack.c.l.b16 %v1302
        %v1319 = vunpack.c.l.b16 %v1303
        %v1320 = vunpack.c.l.b16 %v1304
        %v1321 = vunpack.c.l.b16 %v1305
        %v1322 = vunpack.c.l.b16 %v1306
        %v1323 = vunpack.c.l.b16 %v1307
        %v1324 = vunpack.c.l.b16 %v1308
        %v1325 = vpack.c.b16 %v1318, %v1317
        %v1326 = vpack.c.b16 %v1320, %v1319
        %v1327 = vpack.c.b16 %v1322, %v1321
        %v1328 = vpack.c.b16 %v1324, %v1323
        %v1334 = vsel %vm860, %v1300, 0
        %1336 = vmatprep.subr.bf16.mxu0 0
        %1337 = vmatpush1.bf16.msra.mxu0 %v1325
        %1338 = vmatprep.subr.bf16.mxu0 0
        %1339 = vmatpush1.bf16.msra.mxu0 %v1326
        %1340 = vmatprep.subr.bf16.mxu0 0
        %1341 = vmatpush1.bf16.msra.mxu0 %v1327
        %1342 = vmatprep.subr.bf16.mxu0 0
        %1343 = vmatpush1.bf16.msra.mxu0 %v1328
        %1344 = vmatprep.subr.bf16.mxu0 0
        %1345 = vmatpush1.bf16.msra.mxu0 0
        %1346 = vmatprep.subr.bf16.mxu0 0
        %1347 = vmatpush1.bf16.msra.mxu0 0
        %1348 = vmatprep.subr.bf16.mxu0 0
        %1349 = vmatpush1.bf16.msra.mxu0 0
        %1350 = vmatprep.subr.bf16.mxu0 0
        %1351 = vmatpush1.bf16.msra.mxu0 0
        %1352 = vmatprep.subr.bf16.mxu0 0
        %1353 = vmatpush1.bf16.msra.mxu0 0
        %1354 = vmatprep.subr.bf16.mxu0 0
        %1355 = vmatpush1.bf16.msra.mxu0 0
        %1356 = vmatprep.subr.bf16.mxu0 0
        %1357 = vmatpush1.bf16.msra.mxu0 0
        %1358 = vmatprep.subr.bf16.mxu0 0
        %1359 = vmatpush1.bf16.msra.mxu0 0
        %1360 = vmatprep.subr.bf16.mxu0 0
        %1361 = vmatpush1.bf16.msra.mxu0 0
        %1362 = vmatprep.subr.bf16.mxu0 0
        %1363 = vmatpush1.bf16.msra.mxu0 0
        %1364 = vmatprep.subr.bf16.mxu0 0
        %1365 = vmatpush1.bf16.msra.mxu0 0
        %1366 = vmatprep.subr.bf16.mxu0 0
        %1367 = vmatpush1.bf16.msra.mxu0 0
        %1368 = vmatprep.mubr.bf16.mxu0 0
        %1369 = vmatmul.mubr.bf16.gmra.mrb[0].mxu0 %v1334
        %v1370 = vpop.f32.mrb[0].mxu0
        %v1371 = vadd.f32 0.0, %v1370
        %v1372 = vpop.f32.mrb[0].mxu0
        %v1373 = vpop.f32.mrb[0].mxu0
        %v1374 = vpop.f32.mrb[0].mxu0
        %1375 = vdwg.mxu0
        %v1376 = vpack.c.bf16 %v1291, %v1291
        %v1377 = vld [vmem:[%s7] sm:$0xf]
        %v1378 = vld [vmem:[%s7 + $0x4] sm:$0xf]
        %v1379 = vld [vmem:[%s7 + $0x8] sm:$0xf]
        %v1380 = vld [vmem:[%s7 + $0xc] sm:$0xf]
        %v1381 = vld [vmem:[%s7 + $0x10] sm:$0xf]
        %v1382 = vld [vmem:[%s7 + $0x14] sm:$0xf]
        %v1383 = vld [vmem:[%s7 + $0x18] sm:$0xf]
        %v1384 = vld [vmem:[%s7 + $0x1c] sm:$0xf]
        %v1385 = vld [vmem:[%s7 + $0x20] sm:$0xf]
        %v1386 = vld [vmem:[%s7 + $0x24] sm:$0xf]
        %v1387 = vld [vmem:[%s7 + $0x28] sm:$0xf]
        %v1388 = vld [vmem:[%s7 + $0x2c] sm:$0xf]
        %v1389 = vld [vmem:[%s7 + $0x30] sm:$0xf]
        %v1390 = vld [vmem:[%s7 + $0x34] sm:$0xf]
        %v1391 = vld [vmem:[%s7 + $0x38] sm:$0xf]
        %v1392 = vld [vmem:[%s7 + $0x3c] sm:$0xf]
        %v1409 = vunpack.c.l.b16 %v1377
        %v1410 = vunpack.c.l.b16 %v1378
        %v1411 = vunpack.c.l.b16 %v1379
        %v1412 = vunpack.c.l.b16 %v1380
        %v1413 = vunpack.c.l.b16 %v1381
        %v1414 = vunpack.c.l.b16 %v1382
        %v1415 = vunpack.c.l.b16 %v1383
        %v1416 = vunpack.c.l.b16 %v1384
        %v1417 = vunpack.c.l.b16 %v1385
        %v1418 = vunpack.c.l.b16 %v1386
        %v1419 = vunpack.c.l.b16 %v1387
        %v1420 = vunpack.c.l.b16 %v1388
        %v1421 = vunpack.c.l.b16 %v1389
        %v1422 = vunpack.c.l.b16 %v1390
        %v1423 = vunpack.c.l.b16 %v1391
        %v1424 = vunpack.c.l.b16 %v1392
        %v1425 = vpack.c.b16 %v1410, %v1409
        %v1426 = vpack.c.b16 %v1412, %v1411
        %v1427 = vpack.c.b16 %v1414, %v1413
        %v1428 = vpack.c.b16 %v1416, %v1415
        %v1429 = vpack.c.b16 %v1418, %v1417
        %v1430 = vpack.c.b16 %v1420, %v1419
        %v1431 = vpack.c.b16 %v1422, %v1421
        %v1432 = vpack.c.b16 %v1424, %v1423
        %1441 = vmatprep.subr.bf16.mxu0 0
        %1442 = vmatpush1.bf16.msra.mxu0 %v1425
        %1443 = vmatprep.subr.bf16.mxu0 0
        %1444 = vmatpush1.bf16.msra.mxu0 %v1426
        %1445 = vmatprep.subr.bf16.mxu0 0
        %1446 = vmatpush1.bf16.msra.mxu0 %v1427
        %1447 = vmatprep.subr.bf16.mxu0 0
        %1448 = vmatpush1.bf16.msra.mxu0 %v1428
        %1449 = vmatprep.subr.bf16.mxu0 0
        %1450 = vmatpush1.bf16.msra.mxu0 %v1429
        %1451 = vmatprep.subr.bf16.mxu0 0
        %1452 = vmatpush1.bf16.msra.mxu0 %v1430
        %1453 = vmatprep.subr.bf16.mxu0 0
        %1454 = vmatpush1.bf16.msra.mxu0 %v1431
        %1455 = vmatprep.subr.bf16.mxu0 0
        %1456 = vmatpush1.bf16.msra.mxu0 %v1432
        %1457 = vmatprep.subr.bf16.mxu0 0
        %1458 = vmatpush1.bf16.msra.mxu0 0
        %1459 = vmatprep.subr.bf16.mxu0 0
        %1460 = vmatpush1.bf16.msra.mxu0 0
        %1461 = vmatprep.subr.bf16.mxu0 0
        %1462 = vmatpush1.bf16.msra.mxu0 0
        %1463 = vmatprep.subr.bf16.mxu0 0
        %1464 = vmatpush1.bf16.msra.mxu0 0
        %1465 = vmatprep.subr.bf16.mxu0 0
        %1466 = vmatpush1.bf16.msra.mxu0 0
        %1467 = vmatprep.subr.bf16.mxu0 0
        %1468 = vmatpush1.bf16.msra.mxu0 0
        %1469 = vmatprep.subr.bf16.mxu0 0
        %1470 = vmatpush1.bf16.msra.mxu0 0
        %1471 = vmatprep.subr.bf16.mxu0 0
        %1472 = vmatpush1.bf16.msra.mxu0 0
        %1473 = vmatprep.mubr.bf16.mxu0 0
        %1474 = vmatmul.mubr.bf16.gmra.mrb[0].mxu0 %v1376
        %v1475 = vpop.f32.mrb[0].mxu0
        %v1476 = vadd.f32 0.0, %v1475
        %v1477 = vpop.f32.mrb[0].mxu0
        %v1478 = vpop.f32.mrb[0].mxu0
        %v1479 = vpop.f32.mrb[0].mxu0
        %1480 = vdwg.mxu0
        %v1481 = vpack.c.bf16 %v1298, %v1298
        %v1482 = vpack.c.bf16 %v1299, %v1299
        %v1483 = vld [vmem:[%s8] sm:$0xf]
        %v1484 = vld [vmem:[%s8 + $0x4] sm:$0xf]
        %v1485 = vld [vmem:[%s8 + $0x8] sm:$0xf]
        %v1486 = vld [vmem:[%s8 + $0xc] sm:$0xf]
        %v1487 = vld [vmem:[%s8 + $0x10] sm:$0xf]
        %v1488 = vld [vmem:[%s8 + $0x14] sm:$0xf]
        %v1489 = vld [vmem:[%s8 + $0x18] sm:$0xf]
        %v1490 = vld [vmem:[%s8 + $0x1c] sm:$0xf]
        %v1491 = vld [vmem:[%s8 + $0x20] sm:$0xf]
        %v1492 = vld [vmem:[%s8 + $0x24] sm:$0xf]
        %v1493 = vld [vmem:[%s8 + $0x28] sm:$0xf]
        %v1494 = vld [vmem:[%s8 + $0x2c] sm:$0xf]
        %v1495 = vld [vmem:[%s8 + $0x30] sm:$0xf]
        %v1496 = vld [vmem:[%s8 + $0x34] sm:$0xf]
        %v1497 = vld [vmem:[%s8 + $0x38] sm:$0xf]
        %v1498 = vld [vmem:[%s8 + $0x3c] sm:$0xf]
        %v1499 = vld [vmem:[%s8 + $0x40] sm:$0xf]
        %v1500 = vld [vmem:[%s8 + $0x44] sm:$0xf]
        %v1501 = vld [vmem:[%s8 + $0x48] sm:$0xf]
        %v1502 = vld [vmem:[%s8 + $0x4c] sm:$0xf]
        %v1503 = vld [vmem:[%s8 + $0x50] sm:$0xf]
        %v1504 = vld [vmem:[%s8 + $0x54] sm:$0xf]
        %v1505 = vld [vmem:[%s8 + $0x58] sm:$0xf]
        %v1506 = vld [vmem:[%s8 + $0x5c] sm:$0xf]
        %v1507 = vld [vmem:[%s8 + $0x60] sm:$0xf]
        %v1508 = vld [vmem:[%s8 + $0x64] sm:$0xf]
        %v1509 = vld [vmem:[%s8 + $0x68] sm:$0xf]
        %v1510 = vld [vmem:[%s8 + $0x6c] sm:$0xf]
        %v1511 = vld [vmem:[%s8 + $0x70] sm:$0xf]
        %v1512 = vld [vmem:[%s8 + $0x74] sm:$0xf]
        %v1513 = vld [vmem:[%s8 + $0x78] sm:$0xf]
        %v1514 = vld [vmem:[%s8 + $0x7c] sm:$0xf]
        %v1547 = vunpack.c.l.b16 %v1483
        %v1548 = vunpack.c.l.b16 %v1484
        %v1549 = vunpack.c.l.b16 %v1485
        %v1550 = vunpack.c.l.b16 %v1486
        %v1551 = vunpack.c.l.b16 %v1487
        %v1552 = vunpack.c.l.b16 %v1488
        %v1553 = vunpack.c.l.b16 %v1489
        %v1554 = vunpack.c.l.b16 %v1490
        %v1555 = vunpack.c.l.b16 %v1491
        %v1556 = vunpack.c.l.b16 %v1492
        %v1557 = vunpack.c.l.b16 %v1493
        %v1558 = vunpack.c.l.b16 %v1494
        %v1559 = vunpack.c.l.b16 %v1495
        %v1560 = vunpack.c.l.b16 %v1496
        %v1561 = vunpack.c.l.b16 %v1497
        %v1562 = vunpack.c.l.b16 %v1498
        %v1563 = vunpack.c.l.b16 %v1499
        %v1564 = vunpack.c.l.b16 %v1500
        %v1565 = vunpack.c.l.b16 %v1501
        %v1566 = vunpack.c.l.b16 %v1502
        %v1567 = vunpack.c.l.b16 %v1503
        %v1568 = vunpack.c.l.b16 %v1504
        %v1569 = vunpack.c.l.b16 %v1505
        %v1570 = vunpack.c.l.b16 %v1506
        %v1571 = vunpack.c.l.b16 %v1507
        %v1572 = vunpack.c.l.b16 %v1508
        %v1573 = vunpack.c.l.b16 %v1509
        %v1574 = vunpack.c.l.b16 %v1510
        %v1575 = vunpack.c.l.b16 %v1511
        %v1576 = vunpack.c.l.b16 %v1512
        %v1577 = vunpack.c.l.b16 %v1513
        %v1578 = vunpack.c.l.b16 %v1514
        %v1579 = vpack.c.b16 %v1548, %v1547
        %v1580 = vpack.c.b16 %v1550, %v1549
        %v1581 = vpack.c.b16 %v1552, %v1551
        %v1582 = vpack.c.b16 %v1554, %v1553
        %v1583 = vpack.c.b16 %v1556, %v1555
        %v1584 = vpack.c.b16 %v1558, %v1557
        %v1585 = vpack.c.b16 %v1560, %v1559
        %v1586 = vpack.c.b16 %v1562, %v1561
        %v1587 = vpack.c.b16 %v1564, %v1563
        %v1588 = vpack.c.b16 %v1566, %v1565
        %v1589 = vpack.c.b16 %v1568, %v1567
        %v1590 = vpack.c.b16 %v1570, %v1569
        %v1591 = vpack.c.b16 %v1572, %v1571
        %v1592 = vpack.c.b16 %v1574, %v1573
        %v1593 = vpack.c.b16 %v1576, %v1575
        %v1594 = vpack.c.b16 %v1578, %v1577
        %1611 = vmatprep.subr.bf16.mxu0 0
        %1612 = vmatpush1.bf16.msra.mxu0 %v1579
        %1613 = vmatprep.subr.bf16.mxu0 0
        %1614 = vmatpush1.bf16.msra.mxu0 %v1580
        %1615 = vmatprep.subr.bf16.mxu0 0
        %1616 = vmatpush1.bf16.msra.mxu0 %v1581
        %1617 = vmatprep.subr.bf16.mxu0 0
        %1618 = vmatpush1.bf16.msra.mxu0 %v1582
        %1619 = vmatprep.subr.bf16.mxu0 0
        %1620 = vmatpush1.bf16.msra.mxu0 %v1583
        %1621 = vmatprep.subr.bf16.mxu0 0
        %1622 = vmatpush1.bf16.msra.mxu0 %v1584
        %1623 = vmatprep.subr.bf16.mxu0 0
        %1624 = vmatpush1.bf16.msra.mxu0 %v1585
        %1625 = vmatprep.subr.bf16.mxu0 0
        %1626 = vmatpush1.bf16.msra.mxu0 %v1586
        %1627 = vmatprep.subr.bf16.mxu0 0
        %1628 = vmatpush1.bf16.msra.mxu0 %v1587
        %1629 = vmatprep.subr.bf16.mxu0 0
        %1630 = vmatpush1.bf16.msra.mxu0 %v1588
        %1631 = vmatprep.subr.bf16.mxu0 0
        %1632 = vmatpush1.bf16.msra.mxu0 %v1589
        %1633 = vmatprep.subr.bf16.mxu0 0
        %1634 = vmatpush1.bf16.msra.mxu0 %v1590
        %1635 = vmatprep.subr.bf16.mxu0 0
        %1636 = vmatpush1.bf16.msra.mxu0 %v1591
        %1637 = vmatprep.subr.bf16.mxu0 0
        %1638 = vmatpush1.bf16.msra.mxu0 %v1592
        %1639 = vmatprep.subr.bf16.mxu0 0
        %1640 = vmatpush1.bf16.msra.mxu0 %v1593
        %1641 = vmatprep.subr.bf16.mxu0 0
        %1642 = vmatpush1.bf16.msra.mxu0 %v1594
        %1643 = vmatprep.mubr.bf16.mxu0 %v1482
        %1644 = vmatmul.mubr.bf16.gmra.mrb[0].mxu0 %v1481
        %v1645 = vpop.f32.mrb[0].mxu0
        %v1646 = vadd.f32 0.0, %v1645
        %v1647 = vpop.f32.mrb[0].mxu0
        %v1648 = vpop.f32.mrb[0].mxu0
        %v1649 = vpop.f32.mrb[0].mxu0
        %1650 = vdwg.mxu0
        %v1651 = vpack.c.bf16 %v1371, %v1371
        %v1652 = vld [vmem:[%s9] sm:$0xf]
        %v1653 = vld [vmem:[%s9 + $0x4] sm:$0xf]
        %v1654 = vld [vmem:[%s9 + $0x8] sm:$0xf]
        %v1655 = vld [vmem:[%s9 + $0xc] sm:$0xf]
        %v1656 = vld [vmem:[%s9 + $0x10] sm:$0xf]
        %v1657 = vld [vmem:[%s9 + $0x14] sm:$0xf]
        %v1658 = vld [vmem:[%s9 + $0x18] sm:$0xf]
        %v1659 = vld [vmem:[%s9 + $0x1c] sm:$0xf]
        %v1660 = vld [vmem:[%s9 + $0x20] sm:$0xf]
        %v1661 = vld [vmem:[%s9 + $0x24] sm:$0xf]
        %v1662 = vld [vmem:[%s9 + $0x28] sm:$0xf]
        %v1663 = vld [vmem:[%s9 + $0x2c] sm:$0xf]
        %v1664 = vld [vmem:[%s9 + $0x30] sm:$0xf]
        %v1665 = vld [vmem:[%s9 + $0x34] sm:$0xf]
        %v1666 = vld [vmem:[%s9 + $0x38] sm:$0xf]
        %v1667 = vld [vmem:[%s9 + $0x3c] sm:$0xf]
        %v1668 = vpack.c.bf16 %v1476, %v1476
        %v1669 = vld [vmem:[%s10] sm:$0xf]
        %v1670 = vld [vmem:[%s10 + $0x4] sm:$0xf]
        %v1671 = vld [vmem:[%s10 + $0x8] sm:$0xf]
        %v1672 = vld [vmem:[%s10 + $0xc] sm:$0xf]
        %v1673 = vld [vmem:[%s10 + $0x10] sm:$0xf]
        %v1674 = vld [vmem:[%s10 + $0x14] sm:$0xf]
        %v1675 = vld [vmem:[%s10 + $0x18] sm:$0xf]
        %v1676 = vld [vmem:[%s10 + $0x1c] sm:$0xf]
        %v1677 = vld [vmem:[%s10 + $0x20] sm:$0xf]
        %v1678 = vld [vmem:[%s10 + $0x24] sm:$0xf]
        %v1679 = vld [vmem:[%s10 + $0x28] sm:$0xf]
        %v1680 = vld [vmem:[%s10 + $0x2c] sm:$0xf]
        %v1681 = vld [vmem:[%s10 + $0x30] sm:$0xf]
        %v1682 = vld [vmem:[%s10 + $0x34] sm:$0xf]
        %v1683 = vld [vmem:[%s10 + $0x38] sm:$0xf]
        %v1684 = vld [vmem:[%s10 + $0x3c] sm:$0xf]
        %v1701 = vunpack.c.l.b16 %v1669
        %v1702 = vunpack.c.l.b16 %v1670
        %v1703 = vunpack.c.l.b16 %v1671
        %v1704 = vunpack.c.l.b16 %v1672
        %v1705 = vunpack.c.l.b16 %v1673
        %v1706 = vunpack.c.l.b16 %v1674
        %v1707 = vunpack.c.l.b16 %v1675
        %v1708 = vunpack.c.l.b16 %v1676
        %v1709 = vunpack.c.l.b16 %v1677
        %v1710 = vunpack.c.l.b16 %v1678
        %v1711 = vunpack.c.l.b16 %v1679
        %v1712 = vunpack.c.l.b16 %v1680
        %v1713 = vunpack.c.l.b16 %v1681
        %v1714 = vunpack.c.l.b16 %v1682
        %v1715 = vunpack.c.l.b16 %v1683
        %v1716 = vunpack.c.l.b16 %v1684
        %v1717 = vpack.c.b16 %v1702, %v1701
        %v1718 = vpack.c.b16 %v1704, %v1703
        %v1719 = vpack.c.b16 %v1706, %v1705
        %v1720 = vpack.c.b16 %v1708, %v1707
        %v1721 = vpack.c.b16 %v1710, %v1709
        %v1722 = vpack.c.b16 %v1712, %v1711
        %v1723 = vpack.c.b16 %v1714, %v1713
        %v1724 = vpack.c.b16 %v1716, %v1715
        %1733 = vmatprep.subr.bf16.mxu0 0
        %1734 = vmatpush1.bf16.msra.mxu0 %v1717
        %1735 = vmatprep.subr.bf16.mxu0 0
        %1736 = vmatpush1.bf16.msra.mxu0 %v1718
        %1737 = vmatprep.subr.bf16.mxu0 0
        %1738 = vmatpush1.bf16.msra.mxu0 %v1719
        %1739 = vmatprep.subr.bf16.mxu0 0
        %1740 = vmatpush1.bf16.msra.mxu0 %v1720
        %1741 = vmatprep.subr.bf16.mxu0 0
        %1742 = vmatpush1.bf16.msra.mxu0 %v1721
        %1743 = vmatprep.subr.bf16.mxu0 0
        %1744 = vmatpush1.bf16.msra.mxu0 %v1722
        %1745 = vmatprep.subr.bf16.mxu0 0
        %1746 = vmatpush1.bf16.msra.mxu0 %v1723
        %1747 = vmatprep.subr.bf16.mxu0 0
        %1748 = vmatpush1.bf16.msra.mxu0 %v1724
        %1749 = vmatprep.subr.bf16.mxu0 0
        %1750 = vmatpush1.bf16.msra.mxu0 0
        %1751 = vmatprep.subr.bf16.mxu0 0
        %1752 = vmatpush1.bf16.msra.mxu0 0
        %1753 = vmatprep.subr.bf16.mxu0 0
        %1754 = vmatpush1.bf16.msra.mxu0 0
        %1755 = vmatprep.subr.bf16.mxu0 0
        %1756 = vmatpush1.bf16.msra.mxu0 0
        %1757 = vmatprep.subr.bf16.mxu0 0
        %1758 = vmatpush1.bf16.msra.mxu0 0
        %1759 = vmatprep.subr.bf16.mxu0 0
        %1760 = vmatpush1.bf16.msra.mxu0 0
        %1761 = vmatprep.subr.bf16.mxu0 0
        %1762 = vmatpush1.bf16.msra.mxu0 0
        %1763 = vmatprep.subr.bf16.mxu0 0
        %1764 = vmatpush1.bf16.msra.mxu0 0
        %1765 = vmatprep.mubr.bf16.mxu0 0
        %1766 = vmatmul.mubr.bf16.gmra.mrb[0].mxu0 %v1668
        %v1767 = vpop.f32.mrb[0].mxu0
        %v1768 = vadd.f32 0.0, %v1767
        %v1769 = vpop.f32.mrb[0].mxu0
        %v1770 = vpop.f32.mrb[0].mxu0
        %v1771 = vpop.f32.mrb[0].mxu0
        %1772 = vdwg.mxu0
        %v1789 = vunpack.c.l.b16 %v1652
        %v1790 = vunpack.c.l.b16 %v1653
        %v1791 = vunpack.c.l.b16 %v1654
        %v1792 = vunpack.c.l.b16 %v1655
        %v1793 = vunpack.c.l.b16 %v1656
        %v1794 = vunpack.c.l.b16 %v1657
        %v1795 = vunpack.c.l.b16 %v1658
        %v1796 = vunpack.c.l.b16 %v1659
        %v1797 = vunpack.c.l.b16 %v1660
        %v1798 = vunpack.c.l.b16 %v1661
        %v1799 = vunpack.c.l.b16 %v1662
        %v1800 = vunpack.c.l.b16 %v1663
        %v1801 = vunpack.c.l.b16 %v1664
        %v1802 = vunpack.c.l.b16 %v1665
        %v1803 = vunpack.c.l.b16 %v1666
        %v1804 = vunpack.c.l.b16 %v1667
        %v1805 = vpack.c.b16 %v1790, %v1789
        %v1806 = vpack.c.b16 %v1792, %v1791
        %v1807 = vpack.c.b16 %v1794, %v1793
        %v1808 = vpack.c.b16 %v1796, %v1795
        %v1809 = vpack.c.b16 %v1798, %v1797
        %v1810 = vpack.c.b16 %v1800, %v1799
        %v1811 = vpack.c.b16 %v1802, %v1801
        %v1812 = vpack.c.b16 %v1804, %v1803
        %1821 = vmatprep.subr.bf16.mxu0 0
        %1822 = vmatpush1.bf16.msra.mxu0 %v1805
        %1823 = vmatprep.subr.bf16.mxu0 0
        %1824 = vmatpush1.bf16.msra.mxu0 %v1806
        %1825 = vmatprep.subr.bf16.mxu0 0
        %1826 = vmatpush1.bf16.msra.mxu0 %v1807
        %1827 = vmatprep.subr.bf16.mxu0 0
        %1828 = vmatpush1.bf16.msra.mxu0 %v1808
        %1829 = vmatprep.subr.bf16.mxu0 0
        %1830 = vmatpush1.bf16.msra.mxu0 %v1809
        %1831 = vmatprep.subr.bf16.mxu0 0
        %1832 = vmatpush1.bf16.msra.mxu0 %v1810
        %1833 = vmatprep.subr.bf16.mxu0 0
        %1834 = vmatpush1.bf16.msra.mxu0 %v1811
        %1835 = vmatprep.subr.bf16.mxu0 0
        %1836 = vmatpush1.bf16.msra.mxu0 %v1812
        %1837 = vmatprep.subr.bf16.mxu0 0
        %1838 = vmatpush1.bf16.msra.mxu0 0
        %1839 = vmatprep.subr.bf16.mxu0 0
        %1840 = vmatpush1.bf16.msra.mxu0 0
        %1841 = vmatprep.subr.bf16.mxu0 0
        %1842 = vmatpush1.bf16.msra.mxu0 0
        %1843 = vmatprep.subr.bf16.mxu0 0
        %1844 = vmatpush1.bf16.msra.mxu0 0
        %1845 = vmatprep.subr.bf16.mxu0 0
        %1846 = vmatpush1.bf16.msra.mxu0 0
        %1847 = vmatprep.subr.bf16.mxu0 0
        %1848 = vmatpush1.bf16.msra.mxu0 0
        %1849 = vmatprep.subr.bf16.mxu0 0
        %1850 = vmatpush1.bf16.msra.mxu0 0
        %1851 = vmatprep.subr.bf16.mxu0 0
        %1852 = vmatpush1.bf16.msra.mxu0 0
        %1853 = vmatprep.mubr.bf16.mxu0 0
        %1854 = vmatmul.mubr.bf16.gmra.mrb[0].mxu0 %v1651
        %v1855 = vpop.f32.mrb[0].mxu0
        %v1856 = vadd.f32 %v1768, %v1855
        %v1857 = vpop.f32.mrb[0].mxu0
        %v1858 = vpop.f32.mrb[0].mxu0
        %v1859 = vpop.f32.mrb[0].mxu0
        %1860 = vdwg.mxu0
        %v1861 = vpack.c.bf16 %v1646, %v1646
        %v1862 = vld [vmem:[%s11] sm:$0xf]
        %v1863 = vld [vmem:[%s11 + $0x4] sm:$0xf]
        %v1864 = vld [vmem:[%s11 + $0x8] sm:$0xf]
        %v1865 = vld [vmem:[%s11 + $0xc] sm:$0xf]
        %v1866 = vld [vmem:[%s11 + $0x10] sm:$0xf]
        %v1867 = vld [vmem:[%s11 + $0x14] sm:$0xf]
        %v1868 = vld [vmem:[%s11 + $0x18] sm:$0xf]
        %v1869 = vld [vmem:[%s11 + $0x1c] sm:$0xf]
        %v1870 = vld [vmem:[%s11 + $0x20] sm:$0xf]
        %v1871 = vld [vmem:[%s11 + $0x24] sm:$0xf]
        %v1872 = vld [vmem:[%s11 + $0x28] sm:$0xf]
        %v1873 = vld [vmem:[%s11 + $0x2c] sm:$0xf]
        %v1874 = vld [vmem:[%s11 + $0x30] sm:$0xf]
        %v1875 = vld [vmem:[%s11 + $0x34] sm:$0xf]
        %v1876 = vld [vmem:[%s11 + $0x38] sm:$0xf]
        %v1877 = vld [vmem:[%s11 + $0x3c] sm:$0xf]
        %v1894 = vunpack.c.l.b16 %v1862
        %v1895 = vunpack.c.l.b16 %v1863
        %v1896 = vunpack.c.l.b16 %v1864
        %v1897 = vunpack.c.l.b16 %v1865
        %v1898 = vunpack.c.l.b16 %v1866
        %v1899 = vunpack.c.l.b16 %v1867
        %v1900 = vunpack.c.l.b16 %v1868
        %v1901 = vunpack.c.l.b16 %v1869
        %v1902 = vunpack.c.l.b16 %v1870
        %v1903 = vunpack.c.l.b16 %v1871
        %v1904 = vunpack.c.l.b16 %v1872
        %v1905 = vunpack.c.l.b16 %v1873
        %v1906 = vunpack.c.l.b16 %v1874
        %v1907 = vunpack.c.l.b16 %v1875
        %v1908 = vunpack.c.l.b16 %v1876
        %v1909 = vunpack.c.l.b16 %v1877
        %v1910 = vpack.c.b16 %v1895, %v1894
        %v1911 = vpack.c.b16 %v1897, %v1896
        %v1912 = vpack.c.b16 %v1899, %v1898
        %v1913 = vpack.c.b16 %v1901, %v1900
        %v1914 = vpack.c.b16 %v1903, %v1902
        %v1915 = vpack.c.b16 %v1905, %v1904
        %v1916 = vpack.c.b16 %v1907, %v1906
        %v1917 = vpack.c.b16 %v1909, %v1908
        %1926 = vmatprep.subr.bf16.mxu0 0
        %1927 = vmatpush1.bf16.msra.mxu0 %v1910
        %1928 = vmatprep.subr.bf16.mxu0 0
        %1929 = vmatpush1.bf16.msra.mxu0 %v1911
        %1930 = vmatprep.subr.bf16.mxu0 0
        %1931 = vmatpush1.bf16.msra.mxu0 %v1912
        %1932 = vmatprep.subr.bf16.mxu0 0
        %1933 = vmatpush1.bf16.msra.mxu0 %v1913
        %1934 = vmatprep.subr.bf16.mxu0 0
        %1935 = vmatpush1.bf16.msra.mxu0 %v1914
        %1936 = vmatprep.subr.bf16.mxu0 0
        %1937 = vmatpush1.bf16.msra.mxu0 %v1915
        %1938 = vmatprep.subr.bf16.mxu0 0
        %1939 = vmatpush1.bf16.msra.mxu0 %v1916
        %1940 = vmatprep.subr.bf16.mxu0 0
        %1941 = vmatpush1.bf16.msra.mxu0 %v1917
        %1942 = vmatprep.subr.bf16.mxu0 0
        %1943 = vmatpush1.bf16.msra.mxu0 0
        %1944 = vmatprep.subr.bf16.mxu0 0
        %1945 = vmatpush1.bf16.msra.mxu0 0
        %1946 = vmatprep.subr.bf16.mxu0 0
        %1947 = vmatpush1.bf16.msra.mxu0 0
        %1948 = vmatprep.subr.bf16.mxu0 0
        %1949 = vmatpush1.bf16.msra.mxu0 0
        %1950 = vmatprep.subr.bf16.mxu0 0
        %1951 = vmatpush1.bf16.msra.mxu0 0
        %1952 = vmatprep.subr.bf16.mxu0 0
        %1953 = vmatpush1.bf16.msra.mxu0 0
        %1954 = vmatprep.subr.bf16.mxu0 0
        %1955 = vmatpush1.bf16.msra.mxu0 0
        %1956 = vmatprep.subr.bf16.mxu0 0
        %1957 = vmatpush1.bf16.msra.mxu0 0
        %1958 = vmatprep.mubr.bf16.mxu0 0
        %1959 = vmatmul.mubr.bf16.gmra.mrb[0].mxu0 %v1861
        %v1960 = vpop.f32.mrb[0].mxu0
        %v1961 = vadd.f32 0.0, %v1960
        %v1962 = vpop.f32.mrb[0].mxu0
        %v1963 = vpop.f32.mrb[0].mxu0
        %v1964 = vpop.f32.mrb[0].mxu0
        %1965 = vdwg.mxu0
        %v1966 = vadd.f32 %v1856, %v1961
        %v1967 = vmax.f32 %v1966, 0.0
        %v1968 = vpack.c.bf16 %v1967, %v1967
        %v1969 = vld [vmem:[%s12] sm:$0xf]
        %v1970 = vld [vmem:[%s12 + $0x4] sm:$0xf]
        %v1971 = vld [vmem:[%s12 + $0x8] sm:$0xf]
        %v1972 = vld [vmem:[%s12 + $0xc] sm:$0xf]
        %v1973 = vld [vmem:[%s12 + $0x10] sm:$0xf]
        %v1974 = vld [vmem:[%s12 + $0x14] sm:$0xf]
        %v1975 = vld [vmem:[%s12 + $0x18] sm:$0xf]
        %v1976 = vld [vmem:[%s12 + $0x1c] sm:$0xf]
        %v1977 = vld [vmem:[%s12 + $0x20] sm:$0xf]
        %v1978 = vld [vmem:[%s12 + $0x24] sm:$0xf]
        %v1979 = vld [vmem:[%s12 + $0x28] sm:$0xf]
        %v1980 = vld [vmem:[%s12 + $0x2c] sm:$0xf]
        %v1981 = vld [vmem:[%s12 + $0x30] sm:$0xf]
        %v1982 = vld [vmem:[%s12 + $0x34] sm:$0xf]
        %v1983 = vld [vmem:[%s12 + $0x38] sm:$0xf]
        %v1984 = vld [vmem:[%s12 + $0x3c] sm:$0xf]
        %v2001 = vunpack.c.l.b16 %v1969
        %v2002 = vunpack.c.l.b16 %v1970
        %v2003 = vunpack.c.l.b16 %v1971
        %v2004 = vunpack.c.l.b16 %v1972
        %v2005 = vunpack.c.l.b16 %v1973
        %v2006 = vunpack.c.l.b16 %v1974
        %v2007 = vunpack.c.l.b16 %v1975
        %v2008 = vunpack.c.l.b16 %v1976
        %v2009 = vunpack.c.l.b16 %v1977
        %v2010 = vunpack.c.l.b16 %v1978
        %v2011 = vunpack.c.l.b16 %v1979
        %v2012 = vunpack.c.l.b16 %v1980
        %v2013 = vunpack.c.l.b16 %v1981
        %v2014 = vunpack.c.l.b16 %v1982
        %v2015 = vunpack.c.l.b16 %v1983
        %v2016 = vunpack.c.l.b16 %v1984
        %v2017 = vpack.c.b16 %v2002, %v2001
        %v2018 = vpack.c.b16 %v2004, %v2003
        %v2019 = vpack.c.b16 %v2006, %v2005
        %v2020 = vpack.c.b16 %v2008, %v2007
        %v2021 = vpack.c.b16 %v2010, %v2009
        %v2022 = vpack.c.b16 %v2012, %v2011
        %v2023 = vpack.c.b16 %v2014, %v2013
        %v2024 = vpack.c.b16 %v2016, %v2015
        %2033 = vmatprep.subr.bf16.mxu0 0
        %2034 = vmatpush1.bf16.msra.mxu0 %v2017
        %2035 = vmatprep.subr.bf16.mxu0 0
        %2036 = vmatpush1.bf16.msra.mxu0 %v2018
        %2037 = vmatprep.subr.bf16.mxu0 0
        %2038 = vmatpush1.bf16.msra.mxu0 %v2019
        %2039 = vmatprep.subr.bf16.mxu0 0
        %2040 = vmatpush1.bf16.msra.mxu0 %v2020
        %2041 = vmatprep.subr.bf16.mxu0 0
        %2042 = vmatpush1.bf16.msra.mxu0 %v2021
        %2043 = vmatprep.subr.bf16.mxu0 0
        %2044 = vmatpush1.bf16.msra.mxu0 %v2022
        %2045 = vmatprep.subr.bf16.mxu0 0
        %2046 = vmatpush1.bf16.msra.mxu0 %v2023
        %2047 = vmatprep.subr.bf16.mxu0 0
        %2048 = vmatpush1.bf16.msra.mxu0 %v2024
        %2049 = vmatprep.subr.bf16.mxu0 0
        %2050 = vmatpush1.bf16.msra.mxu0 0
        %2051 = vmatprep.subr.bf16.mxu0 0
        %2052 = vmatpush1.bf16.msra.mxu0 0
        %2053 = vmatprep.subr.bf16.mxu0 0
        %2054 = vmatpush1.bf16.msra.mxu0 0
        %2055 = vmatprep.subr.bf16.mxu0 0
        %2056 = vmatpush1.bf16.msra.mxu0 0
        %2057 = vmatprep.subr.bf16.mxu0 0
        %2058 = vmatpush1.bf16.msra.mxu0 0
        %2059 = vmatprep.subr.bf16.mxu0 0
        %2060 = vmatpush1.bf16.msra.mxu0 0
        %2061 = vmatprep.subr.bf16.mxu0 0
        %2062 = vmatpush1.bf16.msra.mxu0 0
        %2063 = vmatprep.subr.bf16.mxu0 0
        %2064 = vmatpush1.bf16.msra.mxu0 0
        %2065 = vmatprep.mubr.bf16.mxu0 0
        %2066 = vmatmul.mubr.bf16.gmra.mrb[0].mxu0 %v1968
        %v2067 = vpop.f32.mrb[0].mxu0
        %v2068 = vadd.f32 0.0, %v2067
        %v2069 = vpop.f32.mrb[0].mxu0
        %v2070 = vpop.f32.mrb[0].mxu0
        %v2071 = vpop.f32.mrb[0].mxu0
        %2072 = vdwg.mxu0
        %v2073 = vsub.f32 0.0, %v2068
        %v2074 = vmul.f32 %v2073, 1.442695
        %v2075 = vpow.pop %v2074
        %v2076 = vadd.f32 %v2075, 1.0
        %v2077 = vrcp.pop %v2076
        %v2078 = vmul.f32 1.0, %v2077
        %2080 = vset.pattern.permute.xlu0 0
        %2081 = vperm.xlu0 %2080, %v2078
        %v2082 = vpop.permute.xlu0 %2081
        %v2084 = vmul.f32 %v2082, %v1371
        %2085 = vset.pattern.permute.xlu0 1
        %2086 = vperm.xlu0 %2085, %v2078
        %v2087 = vpop.permute.xlu0 %2086
        %v2089 = vmul.f32 %v2087, %v1476
        %v2090 = vadd.f32 %v2084, %v2089
        %2091 = vset.pattern.permute.xlu0 2
        %2092 = vperm.xlu0 %2091, %v2078
        %v2093 = vpop.permute.xlu0 %2092
        %v2095 = vmul.f32 %v2093, %v1646
        %v2096 = vadd.f32 %v2090, %v2095
        %v2097 = vpack.c.bf16 %v2096, %v2096
        %v2098 = vld [vmem:[%s13] sm:$0xf]
        %v2099 = vld [vmem:[%s13 + $0x4] sm:$0xf]
        %v2100 = vld [vmem:[%s13 + $0x8] sm:$0xf]
        %v2101 = vld [vmem:[%s13 + $0xc] sm:$0xf]
        %v2102 = vld [vmem:[%s13 + $0x10] sm:$0xf]
        %v2103 = vld [vmem:[%s13 + $0x14] sm:$0xf]
        %v2104 = vld [vmem:[%s13 + $0x18] sm:$0xf]
        %v2105 = vld [vmem:[%s13 + $0x1c] sm:$0xf]
        %v2106 = vld [vmem:[%s13 + $0x20] sm:$0xf]
        %v2107 = vld [vmem:[%s13 + $0x24] sm:$0xf]
        %v2108 = vld [vmem:[%s13 + $0x28] sm:$0xf]
        %v2109 = vld [vmem:[%s13 + $0x2c] sm:$0xf]
        %v2110 = vld [vmem:[%s13 + $0x30] sm:$0xf]
        %v2111 = vld [vmem:[%s13 + $0x34] sm:$0xf]
        %v2112 = vld [vmem:[%s13 + $0x38] sm:$0xf]
        %v2113 = vld [vmem:[%s13 + $0x3c] sm:$0xf]
        %v2130 = vunpack.c.l.b16 %v2098
        %v2131 = vunpack.c.l.b16 %v2099
        %v2132 = vunpack.c.l.b16 %v2100
        %v2133 = vunpack.c.l.b16 %v2101
        %v2134 = vunpack.c.l.b16 %v2102
        %v2135 = vunpack.c.l.b16 %v2103
        %v2136 = vunpack.c.l.b16 %v2104
        %v2137 = vunpack.c.l.b16 %v2105
        %v2138 = vunpack.c.l.b16 %v2106
        %v2139 = vunpack.c.l.b16 %v2107
        %v2140 = vunpack.c.l.b16 %v2108
        %v2141 = vunpack.c.l.b16 %v2109
        %v2142 = vunpack.c.l.b16 %v2110
        %v2143 = vunpack.c.l.b16 %v2111
        %v2144 = vunpack.c.l.b16 %v2112
        %v2145 = vunpack.c.l.b16 %v2113
        %v2146 = vpack.c.b16 %v2131, %v2130
        %v2147 = vpack.c.b16 %v2133, %v2132
        %v2148 = vpack.c.b16 %v2135, %v2134
        %v2149 = vpack.c.b16 %v2137, %v2136
        %v2150 = vpack.c.b16 %v2139, %v2138
        %v2151 = vpack.c.b16 %v2141, %v2140
        %v2152 = vpack.c.b16 %v2143, %v2142
        %v2153 = vpack.c.b16 %v2145, %v2144
        %2162 = vmatprep.subr.bf16.mxu0 0
        %2163 = vmatpush1.bf16.msra.mxu0 %v2146
        %2164 = vmatprep.subr.bf16.mxu0 0
        %2165 = vmatpush1.bf16.msra.mxu0 %v2147
        %2166 = vmatprep.subr.bf16.mxu0 0
        %2167 = vmatpush1.bf16.msra.mxu0 %v2148
        %2168 = vmatprep.subr.bf16.mxu0 0
        %2169 = vmatpush1.bf16.msra.mxu0 %v2149
        %2170 = vmatprep.subr.bf16.mxu0 0
        %2171 = vmatpush1.bf16.msra.mxu0 %v2150
        %2172 = vmatprep.subr.bf16.mxu0 0
        %2173 = vmatpush1.bf16.msra.mxu0 %v2151
        %2174 = vmatprep.subr.bf16.mxu0 0
        %2175 = vmatpush1.bf16.msra.mxu0 %v2152
        %2176 = vmatprep.subr.bf16.mxu0 0
        %2177 = vmatpush1.bf16.msra.mxu0 %v2153
        %2178 = vmatprep.subr.bf16.mxu0 0
        %2179 = vmatpush1.bf16.msra.mxu0 0
        %2180 = vmatprep.subr.bf16.mxu0 0
        %2181 = vmatpush1.bf16.msra.mxu0 0
        %2182 = vmatprep.subr.bf16.mxu0 0
        %2183 = vmatpush1.bf16.msra.mxu0 0
        %2184 = vmatprep.subr.bf16.mxu0 0
        %2185 = vmatpush1.bf16.msra.mxu0 0
        %2186 = vmatprep.subr.bf16.mxu0 0
        %2187 = vmatpush1.bf16.msra.mxu0 0
        %2188 = vmatprep.subr.bf16.mxu0 0
        %2189 = vmatpush1.bf16.msra.mxu0 0
        %2190 = vmatprep.subr.bf16.mxu0 0
        %2191 = vmatpush1.bf16.msra.mxu0 0
        %2192 = vmatprep.subr.bf16.mxu0 0
        %2193 = vmatpush1.bf16.msra.mxu0 0
        %2194 = vmatprep.mubr.bf16.mxu0 0
        %2195 = vmatmul.mubr.bf16.gmra.mrb[0].mxu0 %v2097
        %v2196 = vpop.f32.mrb[0].mxu0
        %v2197 = vadd.f32 0.0, %v2196
        %v2198 = vpop.f32.mrb[0].mxu0
        %v2199 = vpop.f32.mrb[0].mxu0
        %v2200 = vpop.f32.mrb[0].mxu0
        %2201 = vdwg.mxu0
        %v2202 = vmax.f32 %v2197, 0.0
        %v2203 = vpack.c.bf16 %v2202, %v2202
        %v2204 = vld [vmem:[%s14] sm:$0xf]
        %v2205 = vld [vmem:[%s14 + $0x4] sm:$0xf]
        %v2206 = vld [vmem:[%s14 + $0x8] sm:$0xf]
        %v2207 = vld [vmem:[%s14 + $0xc] sm:$0xf]
        %v2208 = vld [vmem:[%s14 + $0x10] sm:$0xf]
        %v2209 = vld [vmem:[%s14 + $0x14] sm:$0xf]
        %v2210 = vld [vmem:[%s14 + $0x18] sm:$0xf]
        %v2211 = vld [vmem:[%s14 + $0x1c] sm:$0xf]
        %v2212 = vld [vmem:[%s14 + $0x20] sm:$0xf]
        %v2213 = vld [vmem:[%s14 + $0x24] sm:$0xf]
        %v2214 = vld [vmem:[%s14 + $0x28] sm:$0xf]
        %v2215 = vld [vmem:[%s14 + $0x2c] sm:$0xf]
        %v2216 = vld [vmem:[%s14 + $0x30] sm:$0xf]
        %v2217 = vld [vmem:[%s14 + $0x34] sm:$0xf]
        %v2218 = vld [vmem:[%s14 + $0x38] sm:$0xf]
        %v2219 = vld [vmem:[%s14 + $0x3c] sm:$0xf]
        %v2236 = vunpack.c.l.b16 %v2204
        %v2237 = vunpack.c.l.b16 %v2205
        %v2238 = vunpack.c.l.b16 %v2206
        %v2239 = vunpack.c.l.b16 %v2207
        %v2240 = vunpack.c.l.b16 %v2208
        %v2241 = vunpack.c.l.b16 %v2209
        %v2242 = vunpack.c.l.b16 %v2210
        %v2243 = vunpack.c.l.b16 %v2211
        %v2244 = vunpack.c.l.b16 %v2212
        %v2245 = vunpack.c.l.b16 %v2213
        %v2246 = vunpack.c.l.b16 %v2214
        %v2247 = vunpack.c.l.b16 %v2215
        %v2248 = vunpack.c.l.b16 %v2216
        %v2249 = vunpack.c.l.b16 %v2217
        %v2250 = vunpack.c.l.b16 %v2218
        %v2251 = vunpack.c.l.b16 %v2219
        %v2252 = vpack.c.b16 %v2237, %v2236
        %v2253 = vpack.c.b16 %v2239, %v2238
        %v2254 = vpack.c.b16 %v2241, %v2240
        %v2255 = vpack.c.b16 %v2243, %v2242
        %v2256 = vpack.c.b16 %v2245, %v2244
        %v2257 = vpack.c.b16 %v2247, %v2246
        %v2258 = vpack.c.b16 %v2249, %v2248
        %v2259 = vpack.c.b16 %v2251, %v2250
        %2268 = vmatprep.subr.bf16.mxu0 0
        %2269 = vmatpush1.bf16.msra.mxu0 %v2252
        %2270 = vmatprep.subr.bf16.mxu0 0
        %2271 = vmatpush1.bf16.msra.mxu0 %v2253
        %2272 = vmatprep.subr.bf16.mxu0 0
        %2273 = vmatpush1.bf16.msra.mxu0 %v2254
        %2274 = vmatprep.subr.bf16.mxu0 0
        %2275 = vmatpush1.bf16.msra.mxu0 %v2255
        %2276 = vmatprep.subr.bf16.mxu0 0
        %2277 = vmatpush1.bf16.msra.mxu0 %v2256
        %2278 = vmatprep.subr.bf16.mxu0 0
        %2279 = vmatpush1.bf16.msra.mxu0 %v2257
        %2280 = vmatprep.subr.bf16.mxu0 0
        %2281 = vmatpush1.bf16.msra.mxu0 %v2258
        %2282 = vmatprep.subr.bf16.mxu0 0
        %2283 = vmatpush1.bf16.msra.mxu0 %v2259
        %2284 = vmatprep.subr.bf16.mxu0 0
        %2285 = vmatpush1.bf16.msra.mxu0 0
        %2286 = vmatprep.subr.bf16.mxu0 0
        %2287 = vmatpush1.bf16.msra.mxu0 0
        %2288 = vmatprep.subr.bf16.mxu0 0
        %2289 = vmatpush1.bf16.msra.mxu0 0
        %2290 = vmatprep.subr.bf16.mxu0 0
        %2291 = vmatpush1.bf16.msra.mxu0 0
        %2292 = vmatprep.subr.bf16.mxu0 0
        %2293 = vmatpush1.bf16.msra.mxu0 0
        %2294 = vmatprep.subr.bf16.mxu0 0
        %2295 = vmatpush1.bf16.msra.mxu0 0
        %2296 = vmatprep.subr.bf16.mxu0 0
        %2297 = vmatpush1.bf16.msra.mxu0 0
        %2298 = vmatprep.subr.bf16.mxu0 0
        %2299 = vmatpush1.bf16.msra.mxu0 0
        %2300 = vmatprep.mubr.bf16.mxu0 0
        %2301 = vmatmul.mubr.bf16.gmra.mrb[0].mxu0 %v2203
        %v2302 = vpop.f32.mrb[0].mxu0
        %v2303 = vadd.f32 0.0, %v2302
        %v2304 = vpop.f32.mrb[0].mxu0
        %v2305 = vpop.f32.mrb[0].mxu0
        %v2306 = vpop.f32.mrb[0].mxu0
        %2307 = vdwg.mxu0
        %v2308 = vsub.f32 0.0, %v2303
        %v2309 = vmul.f32 %v2308, 1.442695
        %v2310 = vpow.pop %v2309
        %v2311 = vadd.f32 %v2310, 1.0
        %v2312 = vrcp.pop %v2311
        %v2313 = vmul.f32 1.0, %v2312
        %v2314 = vmul.f32 %v2096, %v2313
        %v2315 = vpack.c.bf16 %v2314, %v2314
        %v2316 = vld [vmem:[#allocation5] sm:$0xf]
        %v2317 = vld [vmem:[#allocation5 + $0x4] sm:$0xf]
        %v2318 = vld [vmem:[#allocation5 + $0x8] sm:$0xf]
        %v2319 = vld [vmem:[#allocation5 + $0xc] sm:$0xf]
        %v2320 = vld [vmem:[#allocation5 + $0x10] sm:$0xf]
        %v2321 = vld [vmem:[#allocation5 + $0x14] sm:$0xf]
        %v2322 = vld [vmem:[#allocation5 + $0x18] sm:$0xf]
        %v2323 = vld [vmem:[#allocation5 + $0x1c] sm:$0xf]
        %v2324 = vld [vmem:[#allocation5 + $0x20] sm:$0xf]
        %v2325 = vld [vmem:[#allocation5 + $0x24] sm:$0xf]
        %v2326 = vld [vmem:[#allocation5 + $0x28] sm:$0xf]
        %v2327 = vld [vmem:[#allocation5 + $0x2c] sm:$0xf]
        %v2328 = vld [vmem:[#allocation5 + $0x30] sm:$0xf]
        %v2329 = vld [vmem:[#allocation5 + $0x34] sm:$0xf]
        %v2330 = vld [vmem:[#allocation5 + $0x38] sm:$0xf]
        %v2331 = vld [vmem:[#allocation5 + $0x3c] sm:$0xf]
        %v2332 = vld [vmem:[%s16] sm:$0x1]
        %v2334 = vlaneseq
        %v2335 = vshrl.u32 %v2334, 7
        %v2336 = vsub.s32 0, %v2335
        %v2337 = vrot.slane %v2332, %v2336
        %v2355 = vunpack.c.l.b16 %v2316
        %v2356 = vunpack.c.l.b16 %v2317
        %v2357 = vunpack.c.l.b16 %v2318
        %v2358 = vunpack.c.l.b16 %v2319
        %v2359 = vunpack.c.l.b16 %v2320
        %v2360 = vunpack.c.l.b16 %v2321
        %v2361 = vunpack.c.l.b16 %v2322
        %v2362 = vunpack.c.l.b16 %v2323
        %v2363 = vunpack.c.l.b16 %v2324
        %v2364 = vunpack.c.l.b16 %v2325
        %v2365 = vunpack.c.l.b16 %v2326
        %v2366 = vunpack.c.l.b16 %v2327
        %v2367 = vunpack.c.l.b16 %v2328
        %v2368 = vunpack.c.l.b16 %v2329
        %v2369 = vunpack.c.l.b16 %v2330
        %v2370 = vunpack.c.l.b16 %v2331
        %v2371 = vpack.c.b16 %v2356, %v2355
        %v2372 = vpack.c.b16 %v2358, %v2357
        %v2373 = vpack.c.b16 %v2360, %v2359
        %v2374 = vpack.c.b16 %v2362, %v2361
        %v2375 = vpack.c.b16 %v2364, %v2363
        %v2376 = vpack.c.b16 %v2366, %v2365
        %v2377 = vpack.c.b16 %v2368, %v2367
        %v2378 = vpack.c.b16 %v2370, %v2369
        %2387 = vmatprep.subr.bf16.mxu0 0
        %2388 = vmatpush1.bf16.msra.mxu0 %v2371
        %2389 = vmatprep.subr.bf16.mxu0 0
        %2390 = vmatpush1.bf16.msra.mxu0 %v2372
        %2391 = vmatprep.subr.bf16.mxu0 0
        %2392 = vmatpush1.bf16.msra.mxu0 %v2373
        %2393 = vmatprep.subr.bf16.mxu0 0
        %2394 = vmatpush1.bf16.msra.mxu0 %v2374
        %2395 = vmatprep.subr.bf16.mxu0 0
        %2396 = vmatpush1.bf16.msra.mxu0 %v2375
        %2397 = vmatprep.subr.bf16.mxu0 0
        %2398 = vmatpush1.bf16.msra.mxu0 %v2376
        %2399 = vmatprep.subr.bf16.mxu0 0
        %2400 = vmatpush1.bf16.msra.mxu0 %v2377
        %2401 = vmatprep.subr.bf16.mxu0 0
        %2402 = vmatpush1.bf16.msra.mxu0 %v2378
        %2403 = vmatprep.subr.bf16.mxu0 0
        %2404 = vmatpush1.bf16.msra.mxu0 0
        %2405 = vmatprep.subr.bf16.mxu0 0
        %2406 = vmatpush1.bf16.msra.mxu0 0
        %2407 = vmatprep.subr.bf16.mxu0 0
        %2408 = vmatpush1.bf16.msra.mxu0 0
        %2409 = vmatprep.subr.bf16.mxu0 0
        %2410 = vmatpush1.bf16.msra.mxu0 0
        %2411 = vmatprep.subr.bf16.mxu0 0
        %2412 = vmatpush1.bf16.msra.mxu0 0
        %2413 = vmatprep.subr.bf16.mxu0 0
        %2414 = vmatpush1.bf16.msra.mxu0 0
        %2415 = vmatprep.subr.bf16.mxu0 0
        %2416 = vmatpush1.bf16.msra.mxu0 0
        %2417 = vmatprep.subr.bf16.mxu0 0
        %2418 = vmatpush1.bf16.msra.mxu0 0
        %2419 = vmatprep.mubr.bf16.mxu0 0
        %2420 = vmatmul.mubr.bf16.gmra.mrb[0].mxu0 %v2315
        %v2421 = vpop.f32.mrb[0].mxu0
        %v2422 = vadd.f32 %v2337, %v2421
        %v2423 = vpop.f32.mrb[0].mxu0
        %v2424 = vpop.f32.mrb[0].mxu0
        %v2425 = vpop.f32.mrb[0].mxu0
        %2426 = vdwg.mxu0
        %2427 = vst [vmem:[%s610] sm:$0x3] %v2422
        %s2428 = sand.u32 %s413, 1
        %s2429 = scalar_lea.sflag [#allocation4], %s2428
        %s2430 = sand.u32 %s413, 1
        %s2431 = smul.addr %s2430, 2
        %s2432 = scalar_lea.vmem [#allocation7], %s2431
        // Predicated region
        $region97: #{tpu_custom_call.1} parent=87 // pred_check
          %p2433 = pneg %p423
        $region98: #{tpu_custom_call.1} parent=87 // pred_check_branch
          %2435 = sbr.rel (%p2433) target = $region100
        $region99: #{tpu_custom_call.1} parent=87 // pred_region
          %s2437 = ssub.s32 32, 32
          %2438 = vsyncadd %s2429, %s2437
          %s2439 = smul.addr %s33, 32
          %s2440 = scalar_lea.hbm %s17, %s2439
          %s2442 = sshll.u32 %s2432, 4
          %s2443 = int_to_ptr.vmem [resolvable:$true] %s2442
          %2445 = dma.vmem_to_hbm [thread:$0]  %s2443, 32, %s2440, %s2429
        $region100: #{tpu_custom_call.1} parent=87 // pred_fallthru
          _
      $region88: #{tpu_custom_call.1} parent=5 // pred_fallthru
        _
      %p2446 = scmp.le.s32.totalorder 2, %s28
      // Predicated region
      $region101: #{tpu_custom_call.1} parent=5 // pred_check
        %p2447 = pneg %p2446
      $region102: #{tpu_custom_call.1} parent=5 // pred_check_branch
        %2449 = sbr.rel (%p2447) target = $region104
      $region103: #{tpu_custom_call.1} parent=5 // pred_region
        %s2450 = ssub.s32 %s28, 2
        // Predicated region
        $region105: #{tpu_custom_call.1} parent=103 // pred_check
          %p2451 = pneg %p429
        $region106: #{tpu_custom_call.1} parent=103 // pred_check_branch
          %2453 = sbr.rel (%p2451) target = $region108
        $region107: #{tpu_custom_call.1} parent=103 // pred_region
          %s2454 = sand.u32 %s414, 1
          %s2455 = scalar_lea.sflag [#allocation4], %s2454
          %s2456 = sand.u32 %s414, 1
          %s2457 = smul.addr %s2456, 2
          %s2458 = scalar_lea.vmem [#allocation7], %s2457
          %2459 = dma.done %s2455, 32
        $region108: #{tpu_custom_call.1} parent=103 // pred_fallthru
          _
      $region104: #{tpu_custom_call.1} parent=5 // pred_fallthru
        _
    $region6: #{tpu_custom_call.1} parent=1 // loop_footer
      %s32 = sadd.s32 1, %s28
    $region7: #{tpu_custom_call.1} parent=1 // loop_footer_branch
      %27 = sbr.rel target = $region3
    $region8: #{tpu_custom_call.1} parent=1 // loop_exit
      _
    %2460 = vsyncpa [#allocation3], 1
    %s2461 = scalar_lea.sflag [#allocation3], 1
    %2462 = vsyncpa %s2461, 1
    %2463 = vsyncpa [#allocation6], 1
    %2464 = vsyncpa [#allocation4], 1
    %s2465 = scalar_lea.sflag [#allocation4], 1
    %2466 = vsyncpa %s2465, 1

</llo_original>
